<compile_context>
chip_gen: v7x
topology: tpu7x:2x2x1
jax: 0.10.0
libtpu: 0.0.40
codegen_flags: <defaults>
</compile_context>

<pallas_src>
import math
import functools

import jax
import jax.numpy as jnp
from jax.experimental import pallas as pl
from jax.experimental.pallas import tpu as pltpu

_MiB = 1024 * 1024


# --------------------------------------------------------------------------- #
# Hardware probes (generation-aware tiling / VMEM limits)                     #
# --------------------------------------------------------------------------- #
@functools.lru_cache(maxsize=1)
def _tpu_generation():
    try:
        kind = jax.devices()[0].device_kind.lower()
    except Exception:
        return 0
    for gen in (7, 6, 5, 4):
        if f"v{gen}" in kind or f"tpu{gen}" in kind:
            return gen
    return 0


@functools.lru_cache(maxsize=1)
def _vmem_capacity_bytes():
    try:
        cap = int(getattr(pltpu.get_tpu_info(), "vmem_capacity_bytes", 0))
        if cap > 0:
            return cap
    except Exception:
        pass
    # v5e/v6e: 128 MiB per TensorCore; v7x: 64 MiB; unknown -> conservative.
    return 128 * _MiB if _tpu_generation() in (5, 6) else 64 * _MiB


# --------------------------------------------------------------------------- #
# Kernel                                                                      #
# --------------------------------------------------------------------------- #
def _mab_kernel(q_ref, k_ref,
                wq_ref, bq_ref, wkv_ref, bkv_ref, wo_ref, bo_ref,
                o_ref, ctx_ref,
                *, num_heads, scale, compute_dtype, low_precision_exp):
    Bt, Nq, dim_Q = q_ref.shape
    _, Nk, dim_K = k_ref.shape
    dim_V = wq_ref.shape[1]
    ds = dim_V // num_heads
    cdt = jnp.dtype(compute_dtype)            # MXU operand dtype (bf16 or f32)
    approx = cdt.itemsize < 4                 # approx reciprocal on low-precision path

    # ---- fused input projections on flattened (Bt*N, feature) slabs -------- #
    # Activations arrive in their original dtype; cast to the compute dtype
    # here (cheaper than a separate wrapper-side cast pass over HBM).
    Q2 = q_ref[...].reshape(Bt * Nq, dim_Q).astype(cdt)
    K2 = k_ref[...].reshape(Bt * Nk, dim_K).astype(cdt)

    Qp = jnp.dot(Q2, wq_ref[...], preferred_element_type=jnp.float32) + bq_ref[...]
    # Single matmul for K and V projections (wkv = [wk | wv], width 2*dim_V).
    KVp = jnp.dot(K2, wkv_ref[...], preferred_element_type=jnp.float32) + bkv_ref[...]

    # Residual path stays f32 and 2-D; MXU operands get the compute dtype.
    Qs = (Qp * scale).astype(cdt).reshape(Bt, Nq, dim_V)    # scale folded into Q once
    Kc = KVp[:, :dim_V].astype(cdt).reshape(Bt, Nk, dim_V)
    Vc = KVp[:, dim_V:].astype(cdt).reshape(Bt, Nk, dim_V)

    # ---- per-head attention, batched over the batch tile ------------------- #
    for h in range(num_heads):                # static unroll over heads
        sl = slice(h * ds, (h + 1) * ds)
        # Contract the head dim of both operands directly (no explicit .T).
        S = jnp.einsum("bqd,bkd->bqk", Qs[:, :, sl], Kc[:, :, sl],
                       preferred_element_type=jnp.float32)          # (Bt,Nq,Nk) f32
        S = S - jnp.max(S, axis=-1, keepdims=True)
        if low_precision_exp:
            # v6e/v7x: bf16 EUP exp; row-sum / reciprocal stay f32.
            P = jnp.exp(S.astype(cdt))
            l = jnp.sum(P.astype(jnp.float32), axis=-1, keepdims=True)
            A = P * pl.reciprocal(l, approx=True).astype(cdt)        # stays in cdt
        else:
            P = jnp.exp(S)
            l = jnp.sum(P, axis=-1, keepdims=True)
            A = (P * pl.reciprocal(l, approx=approx)).astype(cdt)
        ctx = jnp.einsum("bqk,bkd->bqd", A, Vc[:, :, sl],
                         preferred_element_type=jnp.float32)          # (Bt,Nq,ds) f32
        # Accumulate head contexts into lane slices of the 2-D f32 scratch
        # (replaces the old per-head concatenate / 3-D residual reshapes).
        ctx_ref[:, sl] = ctx.reshape(Bt * Nq, ds)

    # ---- residual + output projection + ReLU + residual (all 2-D) ---------- #
    O2 = Qp + ctx_ref[...]                                            # Q_ + A @ V_
    Oo = jnp.dot(O2.astype(cdt), wo_ref[...],
                 preferred_element_type=jnp.float32) + bo_ref[...]
    out = O2 + jnp.maximum(Oo, 0.0)
    o_ref[...] = out.reshape(Bt, Nq, dim_V).astype(o_ref.dtype)


# --------------------------------------------------------------------------- #
# pallas_call builder                                                         #
# --------------------------------------------------------------------------- #
@functools.lru_cache(maxsize=None)
def _build_mab_call(B, Nq, Nk, dim_Q, dim_K, dim_V, num_heads, batch_tile,
                    compute_dtype_name, out_dtype_name, low_precision_exp,
                    vmem_limit_bytes):
    Bt = batch_tile
    kernel = functools.partial(_mab_kernel, num_heads=num_heads,
                               scale=1.0 / math.sqrt(dim_V),
                               compute_dtype=compute_dtype_name,
                               low_precision_exp=low_precision_exp)

    def const(shape):
        # Constant weight/bias blocks: same block every step, Pallas will not
        # re-DMA them between consecutive steps.  (Single-buffering via
        # pl.Buffered(1) was dropped: the saving is tiny and the broad
        # exception fallback it needed masked real errors.)
        return pl.BlockSpec(shape, lambda b: (0, 0))

    return pl.pallas_call(
        kernel,
        out_shape=jax.ShapeDtypeStruct((B, Nq, dim_V), jnp.dtype(out_dtype_name)),
        grid_spec=pltpu.PrefetchScalarGridSpec(
            num_scalar_prefetch=0,
            grid=(B // Bt,),
            in_specs=[
                pl.BlockSpec((Bt, Nq, dim_Q), lambda b: (b, 0, 0)),
                pl.BlockSpec((Bt, Nk, dim_K), lambda b: (b, 0, 0)),
                const((dim_Q, dim_V)), const((1, dim_V)),        # wq, bq
                const((dim_K, 2 * dim_V)), const((1, 2 * dim_V)),  # wkv, bkv (fused)
                const((dim_V, dim_V)), const((1, dim_V)),        # wo, bo
            ],
            out_specs=pl.BlockSpec((Bt, Nq, dim_V), lambda b: (b, 0, 0)),
            scratch_shapes=[pltpu.VMEM((Bt * Nq, dim_V), jnp.float32)],
        ),
        compiler_params=pltpu.CompilerParams(
            dimension_semantics=("parallel",),
            vmem_limit_bytes=vmem_limit_bytes),
    )


# --------------------------------------------------------------------------- #
# Tiling heuristics                                                           #
# --------------------------------------------------------------------------- #
def _weight_vmem_bytes(dim_Q, dim_K, dim_V, cbytes):
    f32 = 4
    w = (dim_Q * dim_V + dim_K * 2 * dim_V + dim_V * dim_V) * cbytes
    b = 4 * dim_V * f32
    return 2 * (w + b)                         # double-buffered by the pipeline


def _per_batch_vmem_bytes(Nq, Nk, dim_Q, dim_K, dim_V, in_bytes, out_bytes, cbytes):
    f32 = 4
    per = 2 * (Nq * dim_Q + Nk * dim_K) * in_bytes      # double-buffered input tiles
    per += 2 * Nq * dim_V * out_bytes                   # double-buffered output tiles
    per += (Nq + 2 * Nk) * dim_V * (f32 + cbytes)       # projections: f32 + cdt copies
    per += 3 * Nq * Nk * f32                            # per-head S/P (+ headroom)
    per += 5 * Nq * dim_V * f32                         # ctx scratch + epilogue temps
    return per


def _pick_batch_tile(B, per_b, budget):
    """Largest divisor of B whose per-step working set fits the budget,
    preferring an even grid length (balances v7x's 2 TensorCores and keeps
    >= 2 steps for pipelining)."""
    cap = max(1, budget // max(per_b, 1))
    fitting = [d for d in range(1, B + 1) if B % d == 0 and d <= cap] or [1]
    even = [d for d in fitting if (B // d) % 2 == 0]
    return max(even) if even else max(fitting)


# --------------------------------------------------------------------------- #
# Wrapper                                                                     #
# --------------------------------------------------------------------------- #
def prepare_mab_params(params, *, compute_dtype=jnp.bfloat16):
    """Pack + cast weights ONCE (per review: avoid a per-call HBM cast pass).
    Fuses wk|wv into a single (dim_K, 2*dim_V) weight."""
    cdt = jnp.dtype(compute_dtype)
    r = lambda b: jnp.asarray(b).reshape(1, -1).astype(jnp.float32)
    return dict(
        wq=params["wq"].astype(cdt), bq=r(params["bq"]),
        wkv=jnp.concatenate([params["wk"], params["wv"]], axis=1).astype(cdt),
        bkv=jnp.concatenate([r(params["bk"]), r(params["bv"])], axis=1),
        wo=params["wo"].astype(cdt), bo=r(params["bo"]),
    )


def mab_forward(Q, K, params, *, num_heads, compute_dtype=jnp.bfloat16,
                out_dtype=None, batch_tile=None):
    """Q: (B, Nq, dim_Q), K: (B, Nk, dim_K) -> (B, Nq, dim_V).

    `params` may be raw (wq,bq,wk,bk,wv,bv,wo,bo) or already prepared via
    prepare_mab_params (preferred: weights are cast/fused once)."""
    if "wkv" not in params:
        params = prepare_mab_params(params, compute_dtype=compute_dtype)
    cdt = jnp.dtype(params["wq"].dtype)

    B, Nq, dim_Q = Q.shape
    Bk, Nk, dim_K = K.shape
    assert B == Bk
    dim_V = params["wq"].shape[1]
    assert dim_V % num_heads == 0
    odt = jnp.dtype(out_dtype) if out_dtype is not None else jnp.dtype(Q.dtype)

    # Generation-aware VMEM budget: 75% of per-core capacity (=> ~96 MiB on
    # v5e/v6e, ~48 MiB on v7x), tile budget ~ 1/4 of that minus weights.
    usable = max(32 * _MiB, int(0.75 * _vmem_capacity_bytes()))
    wbytes = _weight_vmem_bytes(dim_Q, dim_K, dim_V, cdt.itemsize)
    per_b = _per_batch_vmem_bytes(Nq, Nk, dim_Q, dim_K, dim_V,
                                  jnp.dtype(Q.dtype).itemsize, odt.itemsize,
                                  cdt.itemsize)
    if batch_tile is None:
        Bt = _pick_batch_tile(B, per_b, max(1, usable // 4 - wbytes))
    else:
        Bt = max(1, min(int(batch_tile), B))
        while B % Bt:
            Bt -= 1

    est = wbytes + Bt * per_b
    vmem_limit = int(min(usable, max(32 * _MiB, 3 * est // 2)))

    # bf16 exp only where the EUP runs bf16 natively (v6e / v7x).
    low_exp = (cdt.itemsize < 4) and (_tpu_generation() >= 6)

    fn = _build_mab_call(B, Nq, Nk, dim_Q, dim_K, dim_V, num_heads, Bt,
                         cdt.name, odt.name, low_exp, vmem_limit)
    # Q/K passed in their original dtype; cast happens inside the kernel.
    return fn(Q, K, params["wq"], params["bq"], params["wkv"], params["bkv"],
              params["wo"], params["bo"])


# --------------------------------------------------------------------------- #
# Params + pure-JAX reference                                                 #
# --------------------------------------------------------------------------- #
def init_mab_params(key, dim_Q, dim_K, dim_V):
    """Deterministic init mimicking nn.Linear default (uniform +-1/sqrt(fan_in)).
    Weights stored as (in, out)."""
    ks = jax.random.split(key, 8)

    def lin(kw, kb, fan_in, fan_out):
        bound = 1.0 / math.sqrt(fan_in)
        w = jax.random.uniform(kw, (fan_in, fan_out), jnp.float32, -bound, bound)
        b = jax.random.uniform(kb, (1, fan_out), jnp.float32, -bound, bound)
        return w, b

    wq, bq = lin(ks[0], ks[1], dim_Q, dim_V)
    wk, bk = lin(ks[2], ks[3], dim_K, dim_V)
    wv, bv = lin(ks[4], ks[5], dim_K, dim_V)
    wo, bo = lin(ks[6], ks[7], dim_V, dim_V)
    return dict(wq=wq, bq=bq, wk=wk, bk=bk, wv=wv, bv=bv, wo=wo, bo=bo)


def mab_reference(Q, K, params, *, num_heads):
    """Pure-JAX reference matching the PyTorch forward exactly (float32)."""
    dim_V = params["wq"].shape[1]
    Qp = Q @ params["wq"] + params["bq"][0]
    Kp = K @ params["wk"] + params["bk"][0]
    Vp = K @ params["wv"] + params["bv"][0]
    split_cat = lambda X: jnp.concatenate(jnp.split(X, num_heads, axis=2), axis=0)
    Q_, K_, V_ = split_cat(Qp), split_cat(Kp), split_cat(Vp)
    A = jax.nn.softmax(jnp.einsum("bqd,bkd->bqk", Q_, K_) / math.sqrt(dim_V), axis=2)
    O_ = Q_ + jnp.einsum("bqk,bkd->bqd", A, V_)
    O = jnp.concatenate(jnp.split(O_, num_heads, axis=0), axis=2)
    O = O + jax.nn.relu(O @ params["wo"] + params["bo"][0])
    return O


# --------------------------------------------------------------------------- #
# Demo / self-test                                                            #
# --------------------------------------------------------------------------- #
if __name__ == "__main__":
    B, Nq, Nk = 4, 8, 8
    dim_Q, dim_K, dim_V, num_heads = 32, 32, 32, 4

    key = jax.random.PRNGKey(0)
    kq, kk, kp = jax.random.split(key, 3)
    Q = jax.random.normal(kq, (B, Nq, dim_Q), jnp.float32)
    K = jax.random.normal(kk, (B, Nk, dim_K), jnp.float32)
    params = init_mab_params(kp, dim_Q, dim_K, dim_V)

    ref = mab_reference(Q, K, params, num_heads=num_heads)

    # Near-exactness check: f32 MXU operands, exact reciprocal, f32 exp.
    out_f32 = jax.block_until_ready(
        mab_forward(Q, K, params, num_heads=num_heads, compute_dtype=jnp.float32))
    assert out_f32.shape == (B, Nq, dim_V)
    assert jnp.allclose(out_f32, ref, atol=1e-3, rtol=1e-3), "f32 kernel mismatch"

    # Performance path: bf16 MXU operands + approx reciprocal (f32 accumulation),
    # weights packed/cast once via prepare_mab_params.  Looser tolerance
    # accounts for bf16 operand rounding + approx reciprocal (~1e-3 relative,
    # so softmax rows don't sum to exactly 1 — expected).
    prepped = prepare_mab_params(params, compute_dtype=jnp.bfloat16)
    out_bf16 = jax.block_until_ready(
        mab_forward(Q, K, prepped, num_heads=num_heads))
    assert out_bf16.shape == (B, Nq, dim_V)
    assert jnp.allclose(out_bf16, ref, atol=1e-1, rtol=1e-1), "bf16 kernel mismatch"

    print("KERNEL_OK")
</pallas_src>

<mosaic_0001>
module attributes {stable_mosaic.version = 11 : i64} {
  func.func @_mab_kernel(%arg0: i32, %arg1: memref<2x8x32xf32, #tpu.memory_space<vmem>>, %arg2: memref<2x8x32xf32, #tpu.memory_space<vmem>>, %arg3: memref<32x32xf32, #tpu.memory_space<vmem>>, %arg4: memref<1x32xf32, #tpu.memory_space<vmem>>, %arg5: memref<32x64xf32, #tpu.memory_space<vmem>>, %arg6: memref<1x64xf32, #tpu.memory_space<vmem>>, %arg7: memref<32x32xf32, #tpu.memory_space<vmem>>, %arg8: memref<1x32xf32, #tpu.memory_space<vmem>>, %arg9: memref<2x8x32xf32, #tpu.memory_space<vmem>>, %arg10: memref<16x32xf32, #tpu.memory_space<vmem>>) attributes {dimension_semantics = [#tpu.dimension_semantics<parallel>], iteration_bounds = array<i64: 2>, scalar_prefetch = 0 : i64, scratch_operands = 1 : i64, tpu.core_type = #tpu.core_type<tc>, window_params = [{transform_indices = @transform_0, window_bounds = array<i64: 2, 8, 32>}, {transform_indices = @transform_1, window_bounds = array<i64: 2, 8, 32>}, {pipeline_mode = #tpu.pipeline_mode<synchronous>, transform_indices = @transform_2, window_bounds = array<i64: 32, 32>}, {pipeline_mode = #tpu.pipeline_mode<synchronous>, transform_indices = @transform_3, window_bounds = array<i64: 1, 32>}, {pipeline_mode = #tpu.pipeline_mode<synchronous>, transform_indices = @transform_4, window_bounds = array<i64: 32, 64>}, {pipeline_mode = #tpu.pipeline_mode<synchronous>, transform_indices = @transform_5, window_bounds = array<i64: 1, 64>}, {pipeline_mode = #tpu.pipeline_mode<synchronous>, transform_indices = @transform_6, window_bounds = array<i64: 32, 32>}, {pipeline_mode = #tpu.pipeline_mode<synchronous>, transform_indices = @transform_7, window_bounds = array<i64: 1, 32>}, {transform_indices = @transform_8, window_bounds = array<i64: 2, 8, 32>}]} {
    %c0 = arith.constant 0 : index
    %c0_0 = arith.constant 0 : index
    %c0_1 = arith.constant 0 : index
    %0 = vector.load %arg1[%c0, %c0_0, %c0_1] : memref<2x8x32xf32, #tpu.memory_space<vmem>>, vector<2x8x32xf32>
    %1 = vector.shape_cast %0 : vector<2x8x32xf32> to vector<16x32xf32>
    %c0_2 = arith.constant 0 : index
    %c0_3 = arith.constant 0 : index
    %c0_4 = arith.constant 0 : index
    %2 = vector.load %arg2[%c0_2, %c0_3, %c0_4] : memref<2x8x32xf32, #tpu.memory_space<vmem>>, vector<2x8x32xf32>
    %3 = vector.shape_cast %2 : vector<2x8x32xf32> to vector<16x32xf32>
    %c0_5 = arith.constant 0 : index
    %c0_6 = arith.constant 0 : index
    %4 = vector.load %arg3[%c0_5, %c0_6] : memref<32x32xf32, #tpu.memory_space<vmem>>, vector<32x32xf32>
    %cst = arith.constant dense<0.000000e+00> : vector<16x32xf32>
    %5 = tpu.matmul %1, %4, %cst {dimension_numbers = #tpu.dot_dimension_numbers<[1], [0], [0], [1], [0, 0, 1, 1], [], []>} : vector<16x32xf32>, vector<32x32xf32>, vector<16x32xf32> -> vector<16x32xf32>
    %c0_7 = arith.constant 0 : index
    %c0_8 = arith.constant 0 : index
    %6 = vector.load %arg4[%c0_7, %c0_8] : memref<1x32xf32, #tpu.memory_space<vmem>>, vector<1x32xf32>
    %7 = vector.broadcast %6 : vector<1x32xf32> to vector<16x32xf32>
    %8 = arith.addf %5, %7 : vector<16x32xf32>
    %c0_9 = arith.constant 0 : index
    %c0_10 = arith.constant 0 : index
    %9 = vector.load %arg5[%c0_9, %c0_10] : memref<32x64xf32, #tpu.memory_space<vmem>>, vector<32x64xf32>
    %cst_11 = arith.constant dense<0.000000e+00> : vector<16x64xf32>
    %10 = tpu.matmul %3, %9, %cst_11 {dimension_numbers = #tpu.dot_dimension_numbers<[1], [0], [0], [1], [0, 0, 1, 1], [], []>} : vector<16x32xf32>, vector<32x64xf32>, vector<16x64xf32> -> vector<16x64xf32>
    %c0_12 = arith.constant 0 : index
    %c0_13 = arith.constant 0 : index
    %11 = vector.load %arg6[%c0_12, %c0_13] : memref<1x64xf32, #tpu.memory_space<vmem>>, vector<1x64xf32>
    %12 = vector.broadcast %11 : vector<1x64xf32> to vector<16x64xf32>
    %13 = arith.addf %10, %12 : vector<16x64xf32>
    %cst_14 = arith.constant 0.176776692 : f32
    %14 = vector.broadcast %cst_14 : f32 to vector<16x32xf32>
    %15 = arith.mulf %8, %14 : vector<16x32xf32>
    %16 = vector.shape_cast %15 : vector<16x32xf32> to vector<2x8x32xf32>
    %17 = vector.extract_strided_slice %13 {offsets = [0, 0], sizes = [16, 32], strides = [1, 1]} : vector<16x64xf32> to vector<16x32xf32>
    %18 = vector.shape_cast %17 : vector<16x32xf32> to vector<2x8x32xf32>
    %19 = vector.extract_strided_slice %13 {offsets = [0, 32], sizes = [16, 32], strides = [1, 1]} : vector<16x64xf32> to vector<16x32xf32>
    %20 = vector.shape_cast %19 : vector<16x32xf32> to vector<2x8x32xf32>
    %21 = vector.extract_strided_slice %16 {offsets = [0, 0, 0], sizes = [2, 8, 8], strides = [1, 1, 1]} : vector<2x8x32xf32> to vector<2x8x8xf32>
    %22 = vector.extract_strided_slice %18 {offsets = [0, 0, 0], sizes = [2, 8, 8], strides = [1, 1, 1]} : vector<2x8x32xf32> to vector<2x8x8xf32>
    "tpu.trace_start"() <{level = 10 : i32, message = "bqd,bkd->bqk"}> : () -> ()
    %cst_15 = arith.constant dense<0.000000e+00> : vector<2x8x8xf32>
    %23 = tpu.matmul %21, %22, %cst_15 {dimension_numbers = #tpu.dot_dimension_numbers<[2], [2], [1], [1], [0, 0, 0, 1, 1, 1], [0], [0]>} : vector<2x8x8xf32>, vector<2x8x8xf32>, vector<2x8x8xf32> -> vector<2x8x8xf32>
    "tpu.trace_stop"() : () -> ()
    %cst_16 = arith.constant dense<0xFF800000> : vector<2x8xf32>
    %24 = vector.multi_reduction <maximumf>, %23, %cst_16 [2] : vector<2x8x8xf32> to vector<2x8xf32>
    %25 = vector.shape_cast %24 : vector<2x8xf32> to vector<2x8x1xf32>
    %26 = vector.broadcast %25 : vector<2x8x1xf32> to vector<2x8x8xf32>
    %27 = arith.subf %23, %26 : vector<2x8x8xf32>
    %28 = math.exp %27 : vector<2x8x8xf32>
    %cst_17 = arith.constant dense<0.000000e+00> : vector<2x8xf32>
    %29 = vector.multi_reduction <add>, %28, %cst_17 [2] : vector<2x8x8xf32> to vector<2x8xf32>
    %30 = vector.shape_cast %29 : vector<2x8xf32> to vector<2x8x1xf32>
    %31 = tpu.reciprocal %30 : vector<2x8x1xf32> -> vector<2x8x1xf32>
    %32 = vector.broadcast %31 : vector<2x8x1xf32> to vector<2x8x8xf32>
    %33 = arith.mulf %28, %32 : vector<2x8x8xf32>
    %34 = vector.extract_strided_slice %20 {offsets = [0, 0, 0], sizes = [2, 8, 8], strides = [1, 1, 1]} : vector<2x8x32xf32> to vector<2x8x8xf32>
    "tpu.trace_start"() <{level = 10 : i32, message = "bqk,bkd->bqd"}> : () -> ()
    %cst_18 = arith.constant dense<0.000000e+00> : vector<2x8x8xf32>
    %35 = tpu.matmul %33, %34, %cst_18 {dimension_numbers = #tpu.dot_dimension_numbers<[2], [1], [1], [2], [0, 0, 0, 1, 1, 2], [0], [0]>} : vector<2x8x8xf32>, vector<2x8x8xf32>, vector<2x8x8xf32> -> vector<2x8x8xf32>
    "tpu.trace_stop"() : () -> ()
    %36 = vector.shape_cast %35 : vector<2x8x8xf32> to vector<16x8xf32>
    %c0_19 = arith.constant 0 : index
    %c0_20 = arith.constant 0 : index
    %37 = vector.load %arg10[%c0_19, %c0_20] : memref<16x32xf32, #tpu.memory_space<vmem>>, vector<16x8xf32>
    tpu.vector_store %arg10[%c0_19, %c0_20], %36 {strides = array<i32>} : memref<16x32xf32, #tpu.memory_space<vmem>>, vector<16x8xf32>,
    %38 = vector.extract_strided_slice %16 {offsets = [0, 0, 8], sizes = [2, 8, 8], strides = [1, 1, 1]} : vector<2x8x32xf32> to vector<2x8x8xf32>
    %39 = vector.extract_strided_slice %18 {offsets = [0, 0, 8], sizes = [2, 8, 8], strides = [1, 1, 1]} : vector<2x8x32xf32> to vector<2x8x8xf32>
    "tpu.trace_start"() <{level = 10 : i32, message = "bqd,bkd->bqk"}> : () -> ()
    %cst_21 = arith.constant dense<0.000000e+00> : vector<2x8x8xf32>
    %40 = tpu.matmul %38, %39, %cst_21 {dimension_numbers = #tpu.dot_dimension_numbers<[2], [2], [1], [1], [0, 0, 0, 1, 1, 1], [0], [0]>} : vector<2x8x8xf32>, vector<2x8x8xf32>, vector<2x8x8xf32> -> vector<2x8x8xf32>
    "tpu.trace_stop"() : () -> ()
    %cst_22 = arith.constant dense<0xFF800000> : vector<2x8xf32>
    %41 = vector.multi_reduction <maximumf>, %40, %cst_22 [2] : vector<2x8x8xf32> to vector<2x8xf32>
    %42 = vector.shape_cast %41 : vector<2x8xf32> to vector<2x8x1xf32>
    %43 = vector.broadcast %42 : vector<2x8x1xf32> to vector<2x8x8xf32>
    %44 = arith.subf %40, %43 : vector<2x8x8xf32>
    %45 = math.exp %44 : vector<2x8x8xf32>
    %cst_23 = arith.constant dense<0.000000e+00> : vector<2x8xf32>
    %46 = vector.multi_reduction <add>, %45, %cst_23 [2] : vector<2x8x8xf32> to vector<2x8xf32>
    %47 = vector.shape_cast %46 : vector<2x8xf32> to vector<2x8x1xf32>
    %48 = tpu.reciprocal %47 : vector<2x8x1xf32> -> vector<2x8x1xf32>
    %49 = vector.broadcast %48 : vector<2x8x1xf32> to vector<2x8x8xf32>
    %50 = arith.mulf %45, %49 : vector<2x8x8xf32>
    %51 = vector.extract_strided_slice %20 {offsets = [0, 0, 8], sizes = [2, 8, 8], strides = [1, 1, 1]} : vector<2x8x32xf32> to vector<2x8x8xf32>
    "tpu.trace_start"() <{level = 10 : i32, message = "bqk,bkd->bqd"}> : () -> ()
    %cst_24 = arith.constant dense<0.000000e+00> : vector<2x8x8xf32>
    %52 = tpu.matmul %50, %51, %cst_24 {dimension_numbers = #tpu.dot_dimension_numbers<[2], [1], [1], [2], [0, 0, 0, 1, 1, 2], [0], [0]>} : vector<2x8x8xf32>, vector<2x8x8xf32>, vector<2x8x8xf32> -> vector<2x8x8xf32>
    "tpu.trace_stop"() : () -> ()
    %53 = vector.shape_cast %52 : vector<2x8x8xf32> to vector<16x8xf32>
    %c0_25 = arith.constant 0 : index
    %c8 = arith.constant 8 : index
    %54 = vector.load %arg10[%c0_25, %c8] : memref<16x32xf32, #tpu.memory_space<vmem>>, vector<16x8xf32>
    tpu.vector_store %arg10[%c0_25, %c8], %53 {strides = array<i32>} : memref<16x32xf32, #tpu.memory_space<vmem>>, vector<16x8xf32>,
    %55 = vector.extract_strided_slice %16 {offsets = [0, 0, 16], sizes = [2, 8, 8], strides = [1, 1, 1]} : vector<2x8x32xf32> to vector<2x8x8xf32>
    %56 = vector.extract_strided_slice %18 {offsets = [0, 0, 16], sizes = [2, 8, 8], strides = [1, 1, 1]} : vector<2x8x32xf32> to vector<2x8x8xf32>
    "tpu.trace_start"() <{level = 10 : i32, message = "bqd,bkd->bqk"}> : () -> ()
    %cst_26 = arith.constant dense<0.000000e+00> : vector<2x8x8xf32>
    %57 = tpu.matmul %55, %56, %cst_26 {dimension_numbers = #tpu.dot_dimension_numbers<[2], [2], [1], [1], [0, 0, 0, 1, 1, 1], [0], [0]>} : vector<2x8x8xf32>, vector<2x8x8xf32>, vector<2x8x8xf32> -> vector<2x8x8xf32>
    "tpu.trace_stop"() : () -> ()
    %cst_27 = arith.constant dense<0xFF800000> : vector<2x8xf32>
    %58 = vector.multi_reduction <maximumf>, %57, %cst_27 [2] : vector<2x8x8xf32> to vector<2x8xf32>
    %59 = vector.shape_cast %58 : vector<2x8xf32> to vector<2x8x1xf32>
    %60 = vector.broadcast %59 : vector<2x8x1xf32> to vector<2x8x8xf32>
    %61 = arith.subf %57, %60 : vector<2x8x8xf32>
    %62 = math.exp %61 : vector<2x8x8xf32>
    %cst_28 = arith.constant dense<0.000000e+00> : vector<2x8xf32>
    %63 = vector.multi_reduction <add>, %62, %cst_28 [2] : vector<2x8x8xf32> to vector<2x8xf32>
    %64 = vector.shape_cast %63 : vector<2x8xf32> to vector<2x8x1xf32>
    %65 = tpu.reciprocal %64 : vector<2x8x1xf32> -> vector<2x8x1xf32>
    %66 = vector.broadcast %65 : vector<2x8x1xf32> to vector<2x8x8xf32>
    %67 = arith.mulf %62, %66 : vector<2x8x8xf32>
    %68 = vector.extract_strided_slice %20 {offsets = [0, 0, 16], sizes = [2, 8, 8], strides = [1, 1, 1]} : vector<2x8x32xf32> to vector<2x8x8xf32>
    "tpu.trace_start"() <{level = 10 : i32, message = "bqk,bkd->bqd"}> : () -> ()
    %cst_29 = arith.constant dense<0.000000e+00> : vector<2x8x8xf32>
    %69 = tpu.matmul %67, %68, %cst_29 {dimension_numbers = #tpu.dot_dimension_numbers<[2], [1], [1], [2], [0, 0, 0, 1, 1, 2], [0], [0]>} : vector<2x8x8xf32>, vector<2x8x8xf32>, vector<2x8x8xf32> -> vector<2x8x8xf32>
    "tpu.trace_stop"() : () -> ()
    %70 = vector.shape_cast %69 : vector<2x8x8xf32> to vector<16x8xf32>
    %c0_30 = arith.constant 0 : index
    %c16 = arith.constant 16 : index
    %71 = vector.load %arg10[%c0_30, %c16] : memref<16x32xf32, #tpu.memory_space<vmem>>, vector<16x8xf32>
    tpu.vector_store %arg10[%c0_30, %c16], %70 {strides = array<i32>} : memref<16x32xf32, #tpu.memory_space<vmem>>, vector<16x8xf32>,
    %72 = vector.extract_strided_slice %16 {offsets = [0, 0, 24], sizes = [2, 8, 8], strides = [1, 1, 1]} : vector<2x8x32xf32> to vector<2x8x8xf32>
    %73 = vector.extract_strided_slice %18 {offsets = [0, 0, 24], sizes = [2, 8, 8], strides = [1, 1, 1]} : vector<2x8x32xf32> to vector<2x8x8xf32>
    "tpu.trace_start"() <{level = 10 : i32, message = "bqd,bkd->bqk"}> : () -> ()
    %cst_31 = arith.constant dense<0.000000e+00> : vector<2x8x8xf32>
    %74 = tpu.matmul %72, %73, %cst_31 {dimension_numbers = #tpu.dot_dimension_numbers<[2], [2], [1], [1], [0, 0, 0, 1, 1, 1], [0], [0]>} : vector<2x8x8xf32>, vector<2x8x8xf32>, vector<2x8x8xf32> -> vector<2x8x8xf32>
    "tpu.trace_stop"() : () -> ()
    %cst_32 = arith.constant dense<0xFF800000> : vector<2x8xf32>
    %75 = vector.multi_reduction <maximumf>, %74, %cst_32 [2] : vector<2x8x8xf32> to vector<2x8xf32>
    %76 = vector.shape_cast %75 : vector<2x8xf32> to vector<2x8x1xf32>
    %77 = vector.broadcast %76 : vector<2x8x1xf32> to vector<2x8x8xf32>
    %78 = arith.subf %74, %77 : vector<2x8x8xf32>
    %79 = math.exp %78 : vector<2x8x8xf32>
    %cst_33 = arith.constant dense<0.000000e+00> : vector<2x8xf32>
    %80 = vector.multi_reduction <add>, %79, %cst_33 [2] : vector<2x8x8xf32> to vector<2x8xf32>
    %81 = vector.shape_cast %80 : vector<2x8xf32> to vector<2x8x1xf32>
    %82 = tpu.reciprocal %81 : vector<2x8x1xf32> -> vector<2x8x1xf32>
    %83 = vector.broadcast %82 : vector<2x8x1xf32> to vector<2x8x8xf32>
    %84 = arith.mulf %79, %83 : vector<2x8x8xf32>
    %85 = vector.extract_strided_slice %20 {offsets = [0, 0, 24], sizes = [2, 8, 8], strides = [1, 1, 1]} : vector<2x8x32xf32> to vector<2x8x8xf32>
    "tpu.trace_start"() <{level = 10 : i32, message = "bqk,bkd->bqd"}> : () -> ()
    %cst_34 = arith.constant dense<0.000000e+00> : vector<2x8x8xf32>
    %86 = tpu.matmul %84, %85, %cst_34 {dimension_numbers = #tpu.dot_dimension_numbers<[2], [1], [1], [2], [0, 0, 0, 1, 1, 2], [0], [0]>} : vector<2x8x8xf32>, vector<2x8x8xf32>, vector<2x8x8xf32> -> vector<2x8x8xf32>
    "tpu.trace_stop"() : () -> ()
    %87 = vector.shape_cast %86 : vector<2x8x8xf32> to vector<16x8xf32>
    %c0_35 = arith.constant 0 : index
    %c24 = arith.constant 24 : index
    %88 = vector.load %arg10[%c0_35, %c24] : memref<16x32xf32, #tpu.memory_space<vmem>>, vector<16x8xf32>
    tpu.vector_store %arg10[%c0_35, %c24], %87 {strides = array<i32>} : memref<16x32xf32, #tpu.memory_space<vmem>>, vector<16x8xf32>,
    %c0_36 = arith.constant 0 : index
    %c0_37 = arith.constant 0 : index
    %89 = vector.load %arg10[%c0_36, %c0_37] : memref<16x32xf32, #tpu.memory_space<vmem>>, vector<16x32xf32>
    %90 = arith.addf %8, %89 : vector<16x32xf32>
    %c0_38 = arith.constant 0 : index
    %c0_39 = arith.constant 0 : index
    %91 = vector.load %arg7[%c0_38, %c0_39] : memref<32x32xf32, #tpu.memory_space<vmem>>, vector<32x32xf32>
    %cst_40 = arith.constant dense<0.000000e+00> : vector<16x32xf32>
    %92 = tpu.matmul %90, %91, %cst_40 {dimension_numbers = #tpu.dot_dimension_numbers<[1], [0], [0], [1], [0, 0, 1, 1], [], []>} : vector<16x32xf32>, vector<32x32xf32>, vector<16x32xf32> -> vector<16x32xf32>
    %c0_41 = arith.constant 0 : index
    %c0_42 = arith.constant 0 : index
    %93 = vector.load %arg8[%c0_41, %c0_42] : memref<1x32xf32, #tpu.memory_space<vmem>>, vector<1x32xf32>
    %94 = vector.broadcast %93 : vector<1x32xf32> to vector<16x32xf32>
    %95 = arith.addf %92, %94 : vector<16x32xf32>
    %cst_43 = arith.constant 0.000000e+00 : f32
    %96 = vector.broadcast %cst_43 : f32 to vector<16x32xf32>
    %97 = arith.maximumf %95, %96 : vector<16x32xf32>
    %98 = arith.addf %90, %97 : vector<16x32xf32>
    %99 = vector.shape_cast %98 : vector<16x32xf32> to vector<2x8x32xf32>
    %c0_44 = arith.constant 0 : index
    %c0_45 = arith.constant 0 : index
    %c0_46 = arith.constant 0 : index
    %100 = vector.load %arg9[%c0_44, %c0_45, %c0_46] : memref<2x8x32xf32, #tpu.memory_space<vmem>>, vector<2x8x32xf32>
    tpu.vector_store %arg9[%c0_44, %c0_45, %c0_46], %99 {strides = array<i32>} : memref<2x8x32xf32, #tpu.memory_space<vmem>>, vector<2x8x32xf32>,
    return
  }
  func.func @transform_0(%arg0: i32) -> (i32, i32, i32) {
    %c0_i32 = arith.constant 0 : i32
    %c0_i32_0 = arith.constant 0 : i32
    %c0_i32_1 = arith.constant 0 : i32
    return %arg0, %c0_i32, %c0_i32_0 : i32, i32, i32
  }
  func.func @transform_1(%arg0: i32) -> (i32, i32, i32) {
    %c0_i32 = arith.constant 0 : i32
    %c0_i32_0 = arith.constant 0 : i32
    %c0_i32_1 = arith.constant 0 : i32
    return %arg0, %c0_i32, %c0_i32_0 : i32, i32, i32
  }
  func.func @transform_2(%arg0: i32) -> (i32, i32) {
    %c0_i32 = arith.constant 0 : i32
    %c0_i32_0 = arith.constant 0 : i32
    %c0_i32_1 = arith.constant 0 : i32
    return %c0_i32, %c0_i32_0 : i32, i32
  }
  func.func @transform_3(%arg0: i32) -> (i32, i32) {
    %c0_i32 = arith.constant 0 : i32
    %c0_i32_0 = arith.constant 0 : i32
    %c0_i32_1 = arith.constant 0 : i32
    return %c0_i32, %c0_i32_0 : i32, i32
  }
  func.func @transform_4(%arg0: i32) -> (i32, i32) {
    %c0_i32 = arith.constant 0 : i32
    %c0_i32_0 = arith.constant 0 : i32
    %c0_i32_1 = arith.constant 0 : i32
    return %c0_i32, %c0_i32_0 : i32, i32
  }
  func.func @transform_5(%arg0: i32) -> (i32, i32) {
    %c0_i32 = arith.constant 0 : i32
    %c0_i32_0 = arith.constant 0 : i32
    %c0_i32_1 = arith.constant 0 : i32
    return %c0_i32, %c0_i32_0 : i32, i32
  }
  func.func @transform_6(%arg0: i32) -> (i32, i32) {
    %c0_i32 = arith.constant 0 : i32
    %c0_i32_0 = arith.constant 0 : i32
    %c0_i32_1 = arith.constant 0 : i32
    return %c0_i32, %c0_i32_0 : i32, i32
  }
  func.func @transform_7(%arg0: i32) -> (i32, i32) {
    %c0_i32 = arith.constant 0 : i32
    %c0_i32_0 = arith.constant 0 : i32
    %c0_i32_1 = arith.constant 0 : i32
    return %c0_i32, %c0_i32_0 : i32, i32
  }
  func.func @transform_8(%arg0: i32) -> (i32, i32, i32) {
    %c0_i32 = arith.constant 0 : i32
    %c0_i32_0 = arith.constant 0 : i32
    %c0_i32_1 = arith.constant 0 : i32
    return %arg0, %c0_i32, %c0_i32_0 : i32, i32, i32
  }
}

</mosaic_0001>

<llo_original>
// kernel: tpu_custom_call.1
$region0: #{tpu_custom_call.1}
  #allocation0 [shape = 'u32[]', space=smem, size = 0x4, offset = 0x4, fixed_abs, tag = 'smem constant byte address 0x4 - core index']
  #allocation1 [shape = 'u32[144,128]{1,0:T(1,128)}', space=vmem, size = 0x12000, scoped, tag = 'internal scratch']
  #allocation2 [shape = 'f32[16,32]{1,0:T(8,128)}', space=vmem, size = 0x2000, scoped, tag = 'scratch operand']
  %s0 = inlined_call_operand.hbm [shape: f32[4,8,32], index: 0, kind: input, shape index: {}]
  %s1 = inlined_call_operand.hbm [shape: f32[4,8,32], index: 1, kind: input, shape index: {}]
  %s2 = inlined_call_operand.hbm [shape: f32[32,32], index: 2, kind: input, shape index: {}]
  %s3 = inlined_call_operand.vmem [shape: f32[1,32], index: 3, kind: input, shape index: {}]
  %s4 = inlined_call_operand.hbm [shape: f32[32,64], index: 4, kind: input, shape index: {}]
  %s5 = inlined_call_operand.vmem [shape: f32[1,64], index: 5, kind: input, shape index: {}]
  %s6 = inlined_call_operand.hbm [shape: f32[32,32], index: 6, kind: input, shape index: {}]
  %s7 = inlined_call_operand.vmem [shape: f32[1,32], index: 7, kind: input, shape index: {}]
  %s8 = inlined_call_operand.hbm [shape: f32[4,8,32], index: 8, kind: output, shape index: {}]
  %s9 = sld [smem:[#allocation0]]
  $region85: #{tpu_custom_call.1} parent=0
    _
  %s11 = ssub.s32 1, %s9
  %s12 = scalar_select 0, %s11, %s9
  $region1: #{tpu_custom_call.1} parent=0
    #allocation3 [shape = 'u8[16384]{0}', space=vmem, size = 0x4000, scoped, tag = 'input window, operand 0']
    #allocation4 [shape = 's32[2]{0}', space=sflag, size = 0x8, scoped, tag = 'scoped memory for tpu_custom_call.1']
    #allocation5 [shape = 's32[2]{0}', space=sflag, size = 0x8, scoped, tag = 'scoped memory for tpu_custom_call.1']
    #allocation6 [shape = 'u8[16384]{0}', space=vmem, size = 0x4000, scoped, tag = 'input window, operand 1']
    #allocation7 [shape = 's32[2]{0}', space=sflag, size = 0x8, scoped, tag = 'scoped memory for tpu_custom_call.1']
    #allocation8 [shape = 'u8[16384]{0}', space=vmem, size = 0x4000, scoped, tag = 'input window, operand 2, single buffered']
    #allocation9 [shape = 'u8[16384]{0}', space=vmem, size = 0x4000, scoped, tag = 'input window, operand 4, single buffered']
    #allocation10 [shape = 's32[1]{0}', space=sflag, size = 0x4, scoped, tag = 'scoped memory for tpu_custom_call.1']
    #allocation11 [shape = 'u8[16384]{0}', space=vmem, size = 0x4000, scoped, tag = 'input window, operand 6, single buffered']
    #allocation12 [shape = 'u8[16384]{0}', space=vmem, size = 0x4000, scoped, tag = 'output window, operand 0']
    %13 = vsyncpa [#allocation4], 0
    %s14 = scalar_lea.sflag [#allocation4], 1
    %15 = vsyncpa %s14, 0
    %16 = vsyncpa [#allocation7], 0
    %s17 = scalar_lea.sflag [#allocation7], 1
    %18 = vsyncpa %s17, 0
    %19 = vsyncpa [#allocation10], 0
    %20 = vsyncpa [#allocation5], 0
    %s21 = scalar_lea.sflag [#allocation5], 1
    %22 = vsyncpa %s21, 0
    loop: start=0, step=1, limit=4
    $region2: #{tpu_custom_call.1} parent=1 // loop_pre_header
      _
    $region3: #{tpu_custom_call.1} parent=1 // loop_header
      %s24 = sphi 0, %s28
      %p25 = scmp.ge.s32.totalorder %s24, 4
      %s34 = sphi 0, %s36
      %s37 = sphi 0, %s34
      %s38 = sphi 0, %s37
      %s54 = sphi 0, %s38
      %s60 = sphi 0, %s62
      %s63 = sphi 0, %s60
      %s64 = sphi 0, %s63
      %s80 = sphi 0, %s64
      %s84 = sphi 0, %s84
      %s86 = sphi 0, %s84
      %s87 = sphi 0, %s86
      %s101 = sphi 0, %s87
      %s105 = sphi 0, %s105
      %s107 = sphi 0, %s105
      %s108 = sphi 0, %s107
      %s122 = sphi 0, %s108
      %s126 = sphi 0, %s126
      %s128 = sphi 0, %s126
      %s129 = sphi 0, %s128
      %s143 = sphi 0, %s129
      %s147 = sphi 0, %s147
      %s149 = sphi 0, %s147
      %s150 = sphi 0, %s149
      %s164 = sphi 0, %s150
      %s168 = sphi 0, %s168
      %s170 = sphi 0, %s168
      %s171 = sphi 0, %s170
      %s185 = sphi 0, %s171
      %s189 = sphi 0, %s189
      %s191 = sphi 0, %s189
      %s192 = sphi 0, %s191
      %s206 = sphi 0, %s192
      %s212 = sphi 0, %s214
      %s215 = sphi 0, %s212
      %s216 = sphi 0, %s215
      %s232 = sphi 0, %s216
    $region4: #{tpu_custom_call.1} parent=1 // loop_header_branch
      %27 = sbr.rel (%p25) target = $region8
    $region5: #{tpu_custom_call.1} parent=1 // loop_body
      %s29 = ssub.s32 %s24, 1
      %s30 = ssub.s32 %s24, 2
      %s31 = sadd.s32 %s24, 1
      %s32 = ssub.s32 %s24, %s31
      %p33 = scmp.eq.s32.totalorder %s32, 0
      %s35 = sadd.s32 %s34, 1
      %s36 = scalar_select %p33, %s34, %s35
      %p39 = pneg %p33
      %p40 = scmp.eq.s32.totalorder %s24, 1
      %p41 = por %p39, %p40
      %p42 = scmp.ne.s32.totalorder %s34, %s37
      %p43 = scmp.eq.s32.totalorder %s24, 0
      %p44 = por %p42, %p43
      %p45 = scmp.ne.s32.totalorder %s34, %s37
      %p46 = scmp.eq.s32.totalorder %s29, 1
      %p47 = por %p45, %p46
      %p48 = scmp.ne.s32.totalorder %s37, %s38
      %p49 = scmp.eq.s32.totalorder %s29, 0
      %p50 = por %p48, %p49
      %p51 = scmp.ne.s32.totalorder %s37, %s38
      %p52 = scmp.eq.s32.totalorder %s30, 1
      %p53 = por %p51, %p52
      %p55 = scmp.ne.s32.totalorder %s38, %s54
      %p56 = scmp.eq.s32.totalorder %s30, 0
      %p57 = por %p55, %p56
      %s58 = ssub.s32 %s24, %s31
      %p59 = scmp.eq.s32.totalorder %s58, 0
      %s61 = sadd.s32 %s60, 1
      %s62 = scalar_select %p59, %s60, %s61
      %p65 = pneg %p59
      %p66 = scmp.eq.s32.totalorder %s24, 1
      %p67 = por %p65, %p66
      %p68 = scmp.ne.s32.totalorder %s60, %s63
      %p69 = scmp.eq.s32.totalorder %s24, 0
      %p70 = por %p68, %p69
      %p71 = scmp.ne.s32.totalorder %s60, %s63
      %p72 = scmp.eq.s32.totalorder %s29, 1
      %p73 = por %p71, %p72
      %p74 = scmp.ne.s32.totalorder %s63, %s64
      %p75 = scmp.eq.s32.totalorder %s29, 0
      %p76 = por %p74, %p75
      %p77 = scmp.ne.s32.totalorder %s63, %s64
      %p78 = scmp.eq.s32.totalorder %s30, 1
      %p79 = por %p77, %p78
      %p81 = scmp.ne.s32.totalorder %s64, %s80
      %p82 = scmp.eq.s32.totalorder %s30, 0
      %p83 = por %p81, %p82
      %s85 = sadd.s32 %s84, 1
      %p88 = scmp.eq.s32.totalorder %s24, 1
      %p89 = scmp.ne.s32.totalorder %s84, %s86
      %p90 = scmp.eq.s32.totalorder %s24, 0
      %p91 = por %p89, %p90
      %p92 = scmp.ne.s32.totalorder %s84, %s86
      %p93 = scmp.eq.s32.totalorder %s29, 1
      %p94 = por %p92, %p93
      %p95 = scmp.ne.s32.totalorder %s86, %s87
      %p96 = scmp.eq.s32.totalorder %s29, 0
      %p97 = por %p95, %p96
      %p98 = scmp.ne.s32.totalorder %s86, %s87
      %p99 = scmp.eq.s32.totalorder %s30, 1
      %p100 = por %p98, %p99
      %p102 = scmp.ne.s32.totalorder %s87, %s101
      %p103 = scmp.eq.s32.totalorder %s30, 0
      %p104 = por %p102, %p103
      %s106 = sadd.s32 %s105, 1
      %p109 = scmp.eq.s32.totalorder %s24, 1
      %p110 = scmp.ne.s32.totalorder %s105, %s107
      %p111 = scmp.eq.s32.totalorder %s24, 0
      %p112 = por %p110, %p111
      %p113 = scmp.ne.s32.totalorder %s105, %s107
      %p114 = scmp.eq.s32.totalorder %s29, 1
      %p115 = por %p113, %p114
      %p116 = scmp.ne.s32.totalorder %s107, %s108
      %p117 = scmp.eq.s32.totalorder %s29, 0
      %p118 = por %p116, %p117
      %p119 = scmp.ne.s32.totalorder %s107, %s108
      %p120 = scmp.eq.s32.totalorder %s30, 1
      %p121 = por %p119, %p120
      %p123 = scmp.ne.s32.totalorder %s108, %s122
      %p124 = scmp.eq.s32.totalorder %s30, 0
      %p125 = por %p123, %p124
      %s127 = sadd.s32 %s126, 1
      %p130 = scmp.eq.s32.totalorder %s24, 1
      %p131 = scmp.ne.s32.totalorder %s126, %s128
      %p132 = scmp.eq.s32.totalorder %s24, 0
      %p133 = por %p131, %p132
      %p134 = scmp.ne.s32.totalorder %s126, %s128
      %p135 = scmp.eq.s32.totalorder %s29, 1
      %p136 = por %p134, %p135
      %p137 = scmp.ne.s32.totalorder %s128, %s129
      %p138 = scmp.eq.s32.totalorder %s29, 0
      %p139 = por %p137, %p138
      %p140 = scmp.ne.s32.totalorder %s128, %s129
      %p141 = scmp.eq.s32.totalorder %s30, 1
      %p142 = por %p140, %p141
      %p144 = scmp.ne.s32.totalorder %s129, %s143
      %p145 = scmp.eq.s32.totalorder %s30, 0
      %p146 = por %p144, %p145
      %s148 = sadd.s32 %s147, 1
      %p151 = scmp.eq.s32.totalorder %s24, 1
      %p152 = scmp.ne.s32.totalorder %s147, %s149
      %p153 = scmp.eq.s32.totalorder %s24, 0
      %p154 = por %p152, %p153
      %p155 = scmp.ne.s32.totalorder %s147, %s149
      %p156 = scmp.eq.s32.totalorder %s29, 1
      %p157 = por %p155, %p156
      %p158 = scmp.ne.s32.totalorder %s149, %s150
      %p159 = scmp.eq.s32.totalorder %s29, 0
      %p160 = por %p158, %p159
      %p161 = scmp.ne.s32.totalorder %s149, %s150
      %p162 = scmp.eq.s32.totalorder %s30, 1
      %p163 = por %p161, %p162
      %p165 = scmp.ne.s32.totalorder %s150, %s164
      %p166 = scmp.eq.s32.totalorder %s30, 0
      %p167 = por %p165, %p166
      %s169 = sadd.s32 %s168, 1
      %p172 = scmp.eq.s32.totalorder %s24, 1
      %p173 = scmp.ne.s32.totalorder %s168, %s170
      %p174 = scmp.eq.s32.totalorder %s24, 0
      %p175 = por %p173, %p174
      %p176 = scmp.ne.s32.totalorder %s168, %s170
      %p177 = scmp.eq.s32.totalorder %s29, 1
      %p178 = por %p176, %p177
      %p179 = scmp.ne.s32.totalorder %s170, %s171
      %p180 = scmp.eq.s32.totalorder %s29, 0
      %p181 = por %p179, %p180
      %p182 = scmp.ne.s32.totalorder %s170, %s171
      %p183 = scmp.eq.s32.totalorder %s30, 1
      %p184 = por %p182, %p183
      %p186 = scmp.ne.s32.totalorder %s171, %s185
      %p187 = scmp.eq.s32.totalorder %s30, 0
      %p188 = por %p186, %p187
      %s190 = sadd.s32 %s189, 1
      %p193 = scmp.eq.s32.totalorder %s24, 1
      %p194 = scmp.ne.s32.totalorder %s189, %s191
      %p195 = scmp.eq.s32.totalorder %s24, 0
      %p196 = por %p194, %p195
      %p197 = scmp.ne.s32.totalorder %s189, %s191
      %p198 = scmp.eq.s32.totalorder %s29, 1
      %p199 = por %p197, %p198
      %p200 = scmp.ne.s32.totalorder %s191, %s192
      %p201 = scmp.eq.s32.totalorder %s29, 0
      %p202 = por %p200, %p201
      %p203 = scmp.ne.s32.totalorder %s191, %s192
      %p204 = scmp.eq.s32.totalorder %s30, 1
      %p205 = por %p203, %p204
      %p207 = scmp.ne.s32.totalorder %s192, %s206
      %p208 = scmp.eq.s32.totalorder %s30, 0
      %p209 = por %p207, %p208
      %s210 = ssub.s32 %s24, %s31
      %p211 = scmp.eq.s32.totalorder %s210, 0
      %s213 = sadd.s32 %s212, 1
      %s214 = scalar_select %p211, %s212, %s213
      %p217 = pneg %p211
      %p218 = scmp.eq.s32.totalorder %s24, 1
      %p219 = por %p217, %p218
      %p220 = scmp.ne.s32.totalorder %s212, %s215
      %p221 = scmp.eq.s32.totalorder %s24, 0
      %p222 = por %p220, %p221
      %p223 = scmp.ne.s32.totalorder %s212, %s215
      %p224 = scmp.eq.s32.totalorder %s29, 1
      %p225 = por %p223, %p224
      %p226 = scmp.ne.s32.totalorder %s215, %s216
      %p227 = scmp.eq.s32.totalorder %s29, 0
      %p228 = por %p226, %p227
      %p229 = scmp.ne.s32.totalorder %s215, %s216
      %p230 = scmp.eq.s32.totalorder %s30, 1
      %p231 = por %p229, %p230
      %p233 = scmp.ne.s32.totalorder %s216, %s232
      %p234 = scmp.eq.s32.totalorder %s30, 0
      %p235 = por %p233, %p234
      %p236 = scmp.le.s32.totalorder 1, %s24
      %p237 = scmp.lt.s32.totalorder %s24, 3
      %p238 = pnand %p236, %p237
      %p239 = pneg %p238
      // Predicated region
      $region9: #{tpu_custom_call.1} parent=5 // pred_check
        _
      $region10: #{tpu_custom_call.1} parent=5 // pred_check_branch
        %241 = sbr.rel (%p238) target = $region12
      $region11: #{tpu_custom_call.1} parent=5 // pred_region
        %s242 = ssub.s32 %s24, 1
        // Predicated region
        $region13: #{tpu_custom_call.1} parent=11 // pred_check
          %p243 = pneg %p97
        $region14: #{tpu_custom_call.1} parent=11 // pred_check_branch
          %245 = sbr.rel (%p243) target = $region16
        $region15: #{tpu_custom_call.1} parent=11 // pred_region
          %s247 = ssub.s32 512, 512
          %248 = vsyncadd [#allocation7], %s247
          %s249 = sshll.u32 [#allocation8], 4
          %s250 = int_to_ptr.vmem [resolvable:$true] %s249
          %255 = dma.hbm_to_vmem [thread:$0]  %s2, 512, %s250, [#allocation7], 128, 128, 8
        $region16: #{tpu_custom_call.1} parent=11 // pred_fallthru
          _
        // Predicated region
        $region17: #{tpu_custom_call.1} parent=11 // pred_check
          %p256 = pneg %p118
        $region18: #{tpu_custom_call.1} parent=11 // pred_check_branch
          %258 = sbr.rel (%p256) target = $region20
        $region19: #{tpu_custom_call.1} parent=11 // pred_region
          _
        $region20: #{tpu_custom_call.1} parent=11 // pred_fallthru
          _
        // Predicated region
        $region21: #{tpu_custom_call.1} parent=11 // pred_check
          %p259 = pneg %p139
        $region22: #{tpu_custom_call.1} parent=11 // pred_check_branch
          %261 = sbr.rel (%p259) target = $region24
        $region23: #{tpu_custom_call.1} parent=11 // pred_region
          %s263 = ssub.s32 512, 512
          %264 = vsyncadd [#allocation10], %s263
          %s265 = sshll.u32 [#allocation9], 4
          %s266 = int_to_ptr.vmem [resolvable:$true] %s265
          %271 = dma.hbm_to_vmem [thread:$0]  %s4, 512, %s266, [#allocation10], 128, 128, 8
        $region24: #{tpu_custom_call.1} parent=11 // pred_fallthru
          _
        // Predicated region
        $region25: #{tpu_custom_call.1} parent=11 // pred_check
          %p272 = pneg %p160
        $region26: #{tpu_custom_call.1} parent=11 // pred_check_branch
          %274 = sbr.rel (%p272) target = $region28
        $region27: #{tpu_custom_call.1} parent=11 // pred_region
          _
        $region28: #{tpu_custom_call.1} parent=11 // pred_fallthru
          _
        // Predicated region
        $region29: #{tpu_custom_call.1} parent=11 // pred_check
          %p275 = pneg %p181
        $region30: #{tpu_custom_call.1} parent=11 // pred_check_branch
          %277 = sbr.rel (%p275) target = $region32
        $region31: #{tpu_custom_call.1} parent=11 // pred_region
          %s279 = ssub.s32 512, 512
          %280 = vsyncadd [#allocation10], %s279
          %s281 = sshll.u32 [#allocation11], 4
          %s282 = int_to_ptr.vmem [resolvable:$true] %s281
          %287 = dma.hbm_to_vmem [thread:$0]  %s6, 512, %s282, [#allocation10], 128, 128, 8
        $region32: #{tpu_custom_call.1} parent=11 // pred_fallthru
          _
        // Predicated region
        $region33: #{tpu_custom_call.1} parent=11 // pred_check
          %p288 = pneg %p202
        $region34: #{tpu_custom_call.1} parent=11 // pred_check_branch
          %290 = sbr.rel (%p288) target = $region36
        $region35: #{tpu_custom_call.1} parent=11 // pred_region
          _
        $region36: #{tpu_custom_call.1} parent=11 // pred_fallthru
          _
      $region12: #{tpu_custom_call.1} parent=5 // pred_fallthru
        _
      %p291 = scmp.lt.s32.totalorder %s24, 2
      // Predicated region
      $region37: #{tpu_custom_call.1} parent=5 // pred_check
        %p292 = pneg %p291
      $region38: #{tpu_custom_call.1} parent=5 // pred_check_branch
        %294 = sbr.rel (%p292) target = $region40
      $region39: #{tpu_custom_call.1} parent=5 // pred_region
        // Predicated region
        $region41: #{tpu_custom_call.1} parent=39 // pred_check
          %p295 = pneg %p44
        $region42: #{tpu_custom_call.1} parent=39 // pred_check_branch
          %297 = sbr.rel (%p295) target = $region44
        $region43: #{tpu_custom_call.1} parent=39 // pred_region
          %s298 = sand.u32 %s34, 1
          %s299 = scalar_lea.sflag [#allocation4], %s298
          %s300 = sand.u32 %s34, 1
          %s301 = smul.addr %s300, 16
          %s302 = scalar_lea.vmem [#allocation3], %s301
          %s303 = smul.u32 2, %s24
          %s305 = ssub.s32 256, 256
          %306 = vsyncadd %s299, %s305
          %s307 = smul.addr %s303, 128
          %s308 = scalar_lea.hbm %s0, %s307
          %s309 = sshll.u32 %s302, 4
          %s310 = int_to_ptr.vmem [resolvable:$true] %s309
          %315 = dma.hbm_to_vmem [thread:$0]  %s308, 256, %s310, %s299, 128, 128, 8
        $region44: #{tpu_custom_call.1} parent=39 // pred_fallthru
          _
        // Predicated region
        $region45: #{tpu_custom_call.1} parent=39 // pred_check
          %p316 = pneg %p70
        $region46: #{tpu_custom_call.1} parent=39 // pred_check_branch
          %318 = sbr.rel (%p316) target = $region48
        $region47: #{tpu_custom_call.1} parent=39 // pred_region
          %s319 = sand.u32 %s24, 1
          %s320 = scalar_lea.sflag [#allocation7], %s319
          %s321 = sand.u32 %s60, 1
          %s322 = smul.addr %s321, 16
          %s323 = scalar_lea.vmem [#allocation6], %s322
          %s324 = smul.u32 2, %s24
          %s326 = ssub.s32 256, 256
          %327 = vsyncadd %s320, %s326
          %s328 = smul.addr %s324, 128
          %s329 = scalar_lea.hbm %s1, %s328
          %s330 = sshll.u32 %s323, 4
          %s331 = int_to_ptr.vmem [resolvable:$true] %s330
          %336 = dma.hbm_to_vmem [thread:$0]  %s329, 256, %s331, %s320, 128, 128, 8
        $region48: #{tpu_custom_call.1} parent=39 // pred_fallthru
          _
      $region40: #{tpu_custom_call.1} parent=5 // pred_fallthru
        _
      %p337 = scmp.le.s32.totalorder 1, %s24
      %p338 = scmp.lt.s32.totalorder %s24, 3
      %p339 = pnand %p337, %p338
      %p340 = pneg %p339
      // Predicated region
      $region49: #{tpu_custom_call.1} parent=5 // pred_check
        _
      $region50: #{tpu_custom_call.1} parent=5 // pred_check_branch
        %342 = sbr.rel (%p339) target = $region52
      $region51: #{tpu_custom_call.1} parent=5 // pred_region
        %s343 = ssub.s32 %s24, 1
        %s344 = sand.u32 %s37, 1
        %s345 = scalar_lea.sflag [#allocation4], %s344
        %s346 = sand.u32 %s37, 1
        %s347 = smul.addr %s346, 16
        %s348 = scalar_lea.vmem [#allocation3], %s347
        // Predicated region
        $region53: #{tpu_custom_call.1} parent=51 // pred_check
          %p349 = pneg %p50
        $region54: #{tpu_custom_call.1} parent=51 // pred_check_branch
          %351 = sbr.rel (%p349) target = $region56
        $region55: #{tpu_custom_call.1} parent=51 // pred_region
          %352 = dma.done %s345, 256
        $region56: #{tpu_custom_call.1} parent=51 // pred_fallthru
          _
        %s353 = sand.u32 %s29, 1
        %s354 = scalar_lea.sflag [#allocation7], %s353
        %s355 = sand.u32 %s63, 1
        %s356 = smul.addr %s355, 16
        %s357 = scalar_lea.vmem [#allocation6], %s356
        // Predicated region
        $region57: #{tpu_custom_call.1} parent=51 // pred_check
          %p358 = pneg %p76
        $region58: #{tpu_custom_call.1} parent=51 // pred_check_branch
          %360 = sbr.rel (%p358) target = $region60
        $region59: #{tpu_custom_call.1} parent=51 // pred_region
          %361 = dma.done %s354, 256
        $region60: #{tpu_custom_call.1} parent=51 // pred_fallthru
          _
        // Predicated region
        $region61: #{tpu_custom_call.1} parent=51 // pred_check
          %p362 = pneg %p97
        $region62: #{tpu_custom_call.1} parent=51 // pred_check_branch
          %364 = sbr.rel (%p362) target = $region64
        $region63: #{tpu_custom_call.1} parent=51 // pred_region
          %365 = dma.done [#allocation7], 512
        $region64: #{tpu_custom_call.1} parent=51 // pred_fallthru
          _
        // Predicated region
        $region65: #{tpu_custom_call.1} parent=51 // pred_check
          %p366 = pneg %p139
        $region66: #{tpu_custom_call.1} parent=51 // pred_check_branch
          %368 = sbr.rel (%p366) target = $region68
        $region67: #{tpu_custom_call.1} parent=51 // pred_region
          %369 = dma.done [#allocation10], 512
        $region68: #{tpu_custom_call.1} parent=51 // pred_fallthru
          _
        // Predicated region
        $region69: #{tpu_custom_call.1} parent=51 // pred_check
          %p370 = pneg %p181
        $region70: #{tpu_custom_call.1} parent=51 // pred_check_branch
          %372 = sbr.rel (%p370) target = $region72
        $region71: #{tpu_custom_call.1} parent=51 // pred_region
          %373 = dma.done [#allocation10], 512
        $region72: #{tpu_custom_call.1} parent=51 // pred_fallthru
          _
        %s374 = sand.u32 %s37, 1
        %s375 = scalar_lea.sflag [#allocation4], %s374
        %s376 = sand.u32 %s37, 1
        %s377 = smul.addr %s376, 16
        %s378 = scalar_lea.vmem [#allocation3], %s377
        %p379 = pneg %p50
        %p380 = pneg %p47
        %s381 = sand.u32 %s29, 1
        %s382 = scalar_lea.sflag [#allocation7], %s381
        %s383 = sand.u32 %s63, 1
        %s384 = smul.addr %s383, 16
        %s385 = scalar_lea.vmem [#allocation6], %s384
        %p386 = pneg %p76
        %p387 = pneg %p73
        %p388 = pneg %p97
        %p389 = pneg %p94
        %p390 = pneg %p118
        %p391 = pneg %p115
        %p392 = pneg %p139
        %p393 = pneg %p136
        %p394 = pneg %p160
        %p395 = pneg %p157
        %p396 = pneg %p181
        %p397 = pneg %p178
        %p398 = pneg %p202
        %p399 = pneg %p199
        %p400 = pneg %p228
        %p401 = pneg %p225
        %s402 = sand.u32 %s215, 1
        %s403 = scalar_lea.sflag [#allocation5], %s402
        %s404 = sand.u32 %s215, 1
        %s405 = smul.addr %s404, 16
        %s406 = scalar_lea.vmem [#allocation12], %s405
        %s407 = smul.u32 2, %s29
        %s408 = smul.u32 2, %s29
        %s409 = smul.u32 2, %s29
        %v410 = vld [vmem:[%s348] sm:$0xff]
        %v411 = vld [vmem:[%s348 + $0x8] sm:$0xff]
        %v412 = vld [vmem:[%s357] sm:$0xff]
        %v413 = vld [vmem:[%s357 + $0x8] sm:$0xff]
        %v414 = vld [vmem:[#allocation8] sm:$0xff]
        %v415 = vld [vmem:[#allocation8 + $0x8] sm:$0xff]
        %v416 = vld [vmem:[#allocation8 + $0x10] sm:$0xff]
        %v417 = vld [vmem:[#allocation8 + $0x18] sm:$0xff]
        %v418 = vld [vmem:[%s3] sm:$0x1]
        %v420 = vlaneseq
        %v421 = vshrl.u32 %v420, 7
        %v422 = vsub.s32 0, %v421
        %v423 = vrot.slane %v418, %v422
        %vm425 = vcmask 261120
        %v427 = vsel %vm425, %v410, 0
        %v430 = vsel %vm425, %v411, 0
        %432 = vmatprep.subr.mxu0 0.0
        %433 = vmatpush1.msra.mxu0 %v414
        %434 = vmatprep.subr.mxu0 0.0
        %435 = vmatpush1.msra.mxu0 %v415
        %436 = vmatprep.subr.mxu0 0.0
        %437 = vmatpush1.msra.mxu0 %v416
        %438 = vmatprep.subr.mxu0 0.0
        %439 = vmatpush1.msra.mxu0 %v417
        %440 = vmatprep.subr.mxu0 0.0
        %441 = vmatpush1.msra.mxu0 0.0
        %442 = vmatprep.subr.mxu0 0.0
        %443 = vmatpush1.msra.mxu0 0.0
        %444 = vmatprep.subr.mxu0 0.0
        %445 = vmatpush1.msra.mxu0 0.0
        %446 = vmatprep.subr.mxu0 0.0
        %447 = vmatpush1.msra.mxu0 0.0
        %448 = vmatprep.subr.mxu0 0.0
        %449 = vmatpush1.msra.mxu0 0.0
        %450 = vmatprep.subr.mxu0 0.0
        %451 = vmatpush1.msra.mxu0 0.0
        %452 = vmatprep.subr.mxu0 0.0
        %453 = vmatpush1.msra.mxu0 0.0
        %454 = vmatprep.subr.mxu0 0.0
        %455 = vmatpush1.msra.mxu0 0.0
        %456 = vmatprep.subr.mxu0 0.0
        %457 = vmatpush1.msra.mxu0 0.0
        %458 = vmatprep.subr.mxu0 0.0
        %459 = vmatpush1.msra.mxu0 0.0
        %460 = vmatprep.subr.mxu0 0.0
        %461 = vmatpush1.msra.mxu0 0.0
        %462 = vmatprep.subr.mxu0 0.0
        %463 = vmatpush1.msra.mxu0 0.0
        %464 = vmatprep.subr.mxu0 0.0
        %465 = vmatpush1.msra.mxu0 0.0
        %466 = vmatprep.subr.mxu0 0.0
        %467 = vmatpush1.msra.mxu0 0.0
        %468 = vmatprep.subr.mxu0 0.0
        %469 = vmatpush1.msra.mxu0 0.0
        %470 = vmatprep.subr.mxu0 0.0
        %471 = vmatpush1.msra.mxu0 0.0
        %472 = vmatprep.subr.mxu0 0.0
        %473 = vmatpush1.msra.mxu0 0.0
        %474 = vmatprep.subr.mxu0 0.0
        %475 = vmatpush1.msra.mxu0 0.0
        %476 = vmatprep.subr.mxu0 0.0
        %477 = vmatpush1.msra.mxu0 0.0
        %478 = vmatprep.subr.mxu0 0.0
        %479 = vmatpush1.msra.mxu0 0.0
        %480 = vmatprep.subr.mxu0 0.0
        %481 = vmatpush1.msra.mxu0 0.0
        %482 = vmatprep.subr.mxu0 0.0
        %483 = vmatpush1.msra.mxu0 0.0
        %484 = vmatprep.subr.mxu0 0.0
        %485 = vmatpush1.msra.mxu0 0.0
        %486 = vmatprep.subr.mxu0 0.0
        %487 = vmatpush1.msra.mxu0 0.0
        %488 = vmatprep.subr.mxu0 0.0
        %489 = vmatpush1.msra.mxu0 0.0
        %490 = vmatprep.subr.mxu0 0.0
        %491 = vmatpush1.msra.mxu0 0.0
        %492 = vmatprep.subr.mxu0 0.0
        %493 = vmatpush1.msra.mxu0 0.0
        %494 = vmatprep.subr.mxu0 0.0
        %495 = vmatpush1.msra.mxu0 0.0
        %496 = vmatprep.mubr.f32.mxu0 0.0
        %497 = vmatmul.mubr.f32.gmra.mrb[0].mxu0 %v427
        %v498 = vpop.f32.mrb[0].mxu0
        %v499 = vadd.f32 %v423, %v498
        %v500 = vpop.f32.mrb[0].mxu0
        %501 = vmatprep.mubr.f32.mxu0 0.0
        %502 = vmatmul.mubr.f32.gmra.mrb[0].mxu0 %v430
        %v503 = vpop.f32.mrb[0].mxu0
        %v504 = vadd.f32 %v423, %v503
        %v505 = vpop.f32.mrb[0].mxu0
        %506 = vdwg.mxu0
        %v507 = vld [vmem:[#allocation9] sm:$0xff]
        %v508 = vld [vmem:[#allocation9 + $0x8] sm:$0xff]
        %v509 = vld [vmem:[#allocation9 + $0x10] sm:$0xff]
        %v510 = vld [vmem:[#allocation9 + $0x18] sm:$0xff]
        %v511 = vld [vmem:[%s5] sm:$0x1]
        %v513 = vlaneseq
        %v514 = vshrl.u32 %v513, 7
        %v515 = vsub.s32 0, %v514
        %v516 = vrot.slane %v511, %v515
        %v519 = vsel %vm425, %v412, 0
        %v522 = vsel %vm425, %v413, 0
        %524 = vmatprep.subr.mxu0 0.0
        %525 = vmatpush1.msra.mxu0 %v507
        %526 = vmatprep.subr.mxu0 0.0
        %527 = vmatpush1.msra.mxu0 %v508
        %528 = vmatprep.subr.mxu0 0.0
        %529 = vmatpush1.msra.mxu0 %v509
        %530 = vmatprep.subr.mxu0 0.0
        %531 = vmatpush1.msra.mxu0 %v510
        %532 = vmatprep.subr.mxu0 0.0
        %533 = vmatpush1.msra.mxu0 0.0
        %534 = vmatprep.subr.mxu0 0.0
        %535 = vmatpush1.msra.mxu0 0.0
        %536 = vmatprep.subr.mxu0 0.0
        %537 = vmatpush1.msra.mxu0 0.0
        %538 = vmatprep.subr.mxu0 0.0
        %539 = vmatpush1.msra.mxu0 0.0
        %540 = vmatprep.subr.mxu0 0.0
        %541 = vmatpush1.msra.mxu0 0.0
        %542 = vmatprep.subr.mxu0 0.0
        %543 = vmatpush1.msra.mxu0 0.0
        %544 = vmatprep.subr.mxu0 0.0
        %545 = vmatpush1.msra.mxu0 0.0
        %546 = vmatprep.subr.mxu0 0.0
        %547 = vmatpush1.msra.mxu0 0.0
        %548 = vmatprep.subr.mxu0 0.0
        %549 = vmatpush1.msra.mxu0 0.0
        %550 = vmatprep.subr.mxu0 0.0
        %551 = vmatpush1.msra.mxu0 0.0
        %552 = vmatprep.subr.mxu0 0.0
        %553 = vmatpush1.msra.mxu0 0.0
        %554 = vmatprep.subr.mxu0 0.0
        %555 = vmatpush1.msra.mxu0 0.0
        %556 = vmatprep.subr.mxu0 0.0
        %557 = vmatpush1.msra.mxu0 0.0
        %558 = vmatprep.subr.mxu0 0.0
        %559 = vmatpush1.msra.mxu0 0.0
        %560 = vmatprep.subr.mxu0 0.0
        %561 = vmatpush1.msra.mxu0 0.0
        %562 = vmatprep.subr.mxu0 0.0
        %563 = vmatpush1.msra.mxu0 0.0
        %564 = vmatprep.subr.mxu0 0.0
        %565 = vmatpush1.msra.mxu0 0.0
        %566 = vmatprep.subr.mxu0 0.0
        %567 = vmatpush1.msra.mxu0 0.0
        %568 = vmatprep.subr.mxu0 0.0
        %569 = vmatpush1.msra.mxu0 0.0
        %570 = vmatprep.subr.mxu0 0.0
        %571 = vmatpush1.msra.mxu0 0.0
        %572 = vmatprep.subr.mxu0 0.0
        %573 = vmatpush1.msra.mxu0 0.0
        %574 = vmatprep.subr.mxu0 0.0
        %575 = vmatpush1.msra.mxu0 0.0
        %576 = vmatprep.subr.mxu0 0.0
        %577 = vmatpush1.msra.mxu0 0.0
        %578 = vmatprep.subr.mxu0 0.0
        %579 = vmatpush1.msra.mxu0 0.0
        %580 = vmatprep.subr.mxu0 0.0
        %581 = vmatpush1.msra.mxu0 0.0
        %582 = vmatprep.subr.mxu0 0.0
        %583 = vmatpush1.msra.mxu0 0.0
        %584 = vmatprep.subr.mxu0 0.0
        %585 = vmatpush1.msra.mxu0 0.0
        %586 = vmatprep.subr.mxu0 0.0
        %587 = vmatpush1.msra.mxu0 0.0
        %588 = vmatprep.mubr.f32.mxu0 0.0
        %589 = vmatmul.mubr.f32.gmra.mrb[0].mxu0 %v519
        %v590 = vpop.f32.mrb[0].mxu0
        %v591 = vadd.f32 %v516, %v590
        %v592 = vpop.f32.mrb[0].mxu0
        %593 = vmatprep.mubr.f32.mxu0 0.0
        %594 = vmatmul.mubr.f32.gmra.mrb[0].mxu0 %v522
        %v595 = vpop.f32.mrb[0].mxu0
        %v596 = vadd.f32 %v516, %v595
        %v597 = vpop.f32.mrb[0].mxu0
        %598 = vdwg.mxu0
        %v599 = vmul.f32 %v499, 0.17677669
        %v600 = vmul.f32 %v504, 0.17677669
        %vm601 = vcmask 64512
        %v603 = vsel %vm601, %v599, 0
        %v606 = vsel %vm601, %v591, 0
        %608 = vmatprep.subr.mxu0 0.0
        %609 = vmatpush1.xpose.msra.mxu0 %v606
        %610 = vmatprep.subr.mxu0 0.0
        %611 = vmatpush1.xpose.msra.mxu0 0.0
        %612 = vmatprep.subr.mxu0 0.0
        %613 = vmatpush1.xpose.msra.mxu0 0.0
        %614 = vmatprep.subr.mxu0 0.0
        %615 = vmatpush1.xpose.msra.mxu0 0.0
        %616 = vmatprep.subr.mxu0 0.0
        %617 = vmatpush1.xpose.msra.mxu0 0.0
        %618 = vmatprep.subr.mxu0 0.0
        %619 = vmatpush1.xpose.msra.mxu0 0.0
        %620 = vmatprep.subr.mxu0 0.0
        %621 = vmatpush1.xpose.msra.mxu0 0.0
        %622 = vmatprep.subr.mxu0 0.0
        %623 = vmatpush1.xpose.msra.mxu0 0.0
        %624 = vmatprep.subr.mxu0 0.0
        %625 = vmatpush1.xpose.msra.mxu0 0.0
        %626 = vmatprep.subr.mxu0 0.0
        %627 = vmatpush1.xpose.msra.mxu0 0.0
        %628 = vmatprep.subr.mxu0 0.0
        %629 = vmatpush1.xpose.msra.mxu0 0.0
        %630 = vmatprep.subr.mxu0 0.0
        %631 = vmatpush1.xpose.msra.mxu0 0.0
        %632 = vmatprep.subr.mxu0 0.0
        %633 = vmatpush1.xpose.msra.mxu0 0.0
        %634 = vmatprep.subr.mxu0 0.0
        %635 = vmatpush1.xpose.msra.mxu0 0.0
        %636 = vmatprep.subr.mxu0 0.0
        %637 = vmatpush1.xpose.msra.mxu0 0.0
        %638 = vmatprep.subr.mxu0 0.0
        %639 = vmatpush1.xpose.msra.mxu0 0.0
        %640 = vmatprep.subr.mxu0 0.0
        %641 = vmatpush1.xpose.msra.mxu0 0.0
        %642 = vmatprep.subr.mxu0 0.0
        %643 = vmatpush1.xpose.msra.mxu0 0.0
        %644 = vmatprep.subr.mxu0 0.0
        %645 = vmatpush1.xpose.msra.mxu0 0.0
        %646 = vmatprep.subr.mxu0 0.0
        %647 = vmatpush1.xpose.msra.mxu0 0.0
        %648 = vmatprep.subr.mxu0 0.0
        %649 = vmatpush1.xpose.msra.mxu0 0.0
        %650 = vmatprep.subr.mxu0 0.0
        %651 = vmatpush1.xpose.msra.mxu0 0.0
        %652 = vmatprep.subr.mxu0 0.0
        %653 = vmatpush1.xpose.msra.mxu0 0.0
        %654 = vmatprep.subr.mxu0 0.0
        %655 = vmatpush1.xpose.msra.mxu0 0.0
        %656 = vmatprep.subr.mxu0 0.0
        %657 = vmatpush1.xpose.msra.mxu0 0.0
        %658 = vmatprep.subr.mxu0 0.0
        %659 = vmatpush1.xpose.msra.mxu0 0.0
        %660 = vmatprep.subr.mxu0 0.0
        %661 = vmatpush1.xpose.msra.mxu0 0.0
        %662 = vmatprep.subr.mxu0 0.0
        %663 = vmatpush1.xpose.msra.mxu0 0.0
        %664 = vmatprep.subr.mxu0 0.0
        %665 = vmatpush1.xpose.msra.mxu0 0.0
        %666 = vmatprep.subr.mxu0 0.0
        %667 = vmatpush1.xpose.msra.mxu0 0.0
        %668 = vmatprep.subr.mxu0 0.0
        %669 = vmatpush1.xpose.msra.mxu0 0.0
        %670 = vmatprep.subr.mxu0 0.0
        %671 = vmatpush1.xpose.msra.mxu0 0.0
        %672 = vmatprep.mubr.f32.mxu0 0.0
        %673 = vmatmul.mubr.f32.gmra.mrb[0].mxu0 %v603
        %v674 = vpop.f32.mrb[0].mxu0
        %v675 = vadd.f32 0.0, %v674
        %v676 = vpop.f32.mrb[0].mxu0
        %677 = vdwg.mxu0
        %v679 = vsel %vm601, %v600, 0
        %v682 = vsel %vm601, %v596, 0
        %684 = vmatprep.subr.mxu0 0.0
        %685 = vmatpush1.xpose.msra.mxu0 %v682
        %686 = vmatprep.subr.mxu0 0.0
        %687 = vmatpush1.xpose.msra.mxu0 0.0
        %688 = vmatprep.subr.mxu0 0.0
        %689 = vmatpush1.xpose.msra.mxu0 0.0
        %690 = vmatprep.subr.mxu0 0.0
        %691 = vmatpush1.xpose.msra.mxu0 0.0
        %692 = vmatprep.subr.mxu0 0.0
        %693 = vmatpush1.xpose.msra.mxu0 0.0
        %694 = vmatprep.subr.mxu0 0.0
        %695 = vmatpush1.xpose.msra.mxu0 0.0
        %696 = vmatprep.subr.mxu0 0.0
        %697 = vmatpush1.xpose.msra.mxu0 0.0
        %698 = vmatprep.subr.mxu0 0.0
        %699 = vmatpush1.xpose.msra.mxu0 0.0
        %700 = vmatprep.subr.mxu0 0.0
        %701 = vmatpush1.xpose.msra.mxu0 0.0
        %702 = vmatprep.subr.mxu0 0.0
        %703 = vmatpush1.xpose.msra.mxu0 0.0
        %704 = vmatprep.subr.mxu0 0.0
        %705 = vmatpush1.xpose.msra.mxu0 0.0
        %706 = vmatprep.subr.mxu0 0.0
        %707 = vmatpush1.xpose.msra.mxu0 0.0
        %708 = vmatprep.subr.mxu0 0.0
        %709 = vmatpush1.xpose.msra.mxu0 0.0
        %710 = vmatprep.subr.mxu0 0.0
        %711 = vmatpush1.xpose.msra.mxu0 0.0
        %712 = vmatprep.subr.mxu0 0.0
        %713 = vmatpush1.xpose.msra.mxu0 0.0
        %714 = vmatprep.subr.mxu0 0.0
        %715 = vmatpush1.xpose.msra.mxu0 0.0
        %716 = vmatprep.subr.mxu0 0.0
        %717 = vmatpush1.xpose.msra.mxu0 0.0
        %718 = vmatprep.subr.mxu0 0.0
        %719 = vmatpush1.xpose.msra.mxu0 0.0
        %720 = vmatprep.subr.mxu0 0.0
        %721 = vmatpush1.xpose.msra.mxu0 0.0
        %722 = vmatprep.subr.mxu0 0.0
        %723 = vmatpush1.xpose.msra.mxu0 0.0
        %724 = vmatprep.subr.mxu0 0.0
        %725 = vmatpush1.xpose.msra.mxu0 0.0
        %726 = vmatprep.subr.mxu0 0.0
        %727 = vmatpush1.xpose.msra.mxu0 0.0
        %728 = vmatprep.subr.mxu0 0.0
        %729 = vmatpush1.xpose.msra.mxu0 0.0
        %730 = vmatprep.subr.mxu0 0.0
        %731 = vmatpush1.xpose.msra.mxu0 0.0
        %732 = vmatprep.subr.mxu0 0.0
        %733 = vmatpush1.xpose.msra.mxu0 0.0
        %734 = vmatprep.subr.mxu0 0.0
        %735 = vmatpush1.xpose.msra.mxu0 0.0
        %736 = vmatprep.subr.mxu0 0.0
        %737 = vmatpush1.xpose.msra.mxu0 0.0
        %738 = vmatprep.subr.mxu0 0.0
        %739 = vmatpush1.xpose.msra.mxu0 0.0
        %740 = vmatprep.subr.mxu0 0.0
        %741 = vmatpush1.xpose.msra.mxu0 0.0
        %742 = vmatprep.subr.mxu0 0.0
        %743 = vmatpush1.xpose.msra.mxu0 0.0
        %744 = vmatprep.subr.mxu0 0.0
        %745 = vmatpush1.xpose.msra.mxu0 0.0
        %746 = vmatprep.subr.mxu0 0.0
        %747 = vmatpush1.xpose.msra.mxu0 0.0
        %748 = vmatprep.mubr.f32.mxu0 0.0
        %749 = vmatmul.mubr.f32.gmra.mrb[0].mxu0 %v679
        %v750 = vpop.f32.mrb[0].mxu0
        %v751 = vadd.f32 0.0, %v750
        %v752 = vpop.f32.mrb[0].mxu0
        %753 = vdwg.mxu0
        %v754 = vsel %vm601, %v675, -inf
        %755 = vmax.xlane.f32.xlu0 %v754
        %v756 = vpop.xlane.xlu0 %755
        %v757 = vsel %vm601, %v751, -inf
        %758 = vmax.xlane.f32.xlu0 %v757
        %v759 = vpop.xlane.xlu0 %758
        %v760 = vsub.f32 %v675, %v756
        %v761 = vsub.f32 %v751, %v759
        %v762 = vmul.f32 %v760, 1.442695
        %v763 = vpow.pop %v762
        %v764 = vmul.f32 %v761, 1.442695
        %v765 = vpow.pop %v764
        %v766 = vsel %vm601, %v763, 0.0
        %767 = vadd.xlane.f32.xlu0 %v766
        %v768 = vpop.xlane.xlu0 %767
        %v769 = vsel %vm601, %v765, 0.0
        %770 = vadd.xlane.f32.xlu0 %v769
        %v771 = vpop.xlane.xlu0 %770
        %v772 = vrcp.pop %v768
        %v773 = vrcp.pop %v771
        %v774 = vmul.f32 %v763, %v772
        %v775 = vmul.f32 %v765, %v773
        %776 = vrot.lane.b32.xlu0 %v591, 96
        %v777 = vpop.permute.xlu0 %776
        %v780 = vsel %vm601, %v774, 0
        %782 = vmatprep.subr.mxu0 0.0
        %783 = vmatpush1.msra.mxu0 %v777
        %784 = vmatprep.subr.mxu0 0.0
        %785 = vmatpush1.msra.mxu0 0.0
        %786 = vmatprep.subr.mxu0 0.0
        %787 = vmatpush1.msra.mxu0 0.0
        %788 = vmatprep.subr.mxu0 0.0
        %789 = vmatpush1.msra.mxu0 0.0
        %790 = vmatprep.subr.mxu0 0.0
        %791 = vmatpush1.msra.mxu0 0.0
        %792 = vmatprep.subr.mxu0 0.0
        %793 = vmatpush1.msra.mxu0 0.0
        %794 = vmatprep.subr.mxu0 0.0
        %795 = vmatpush1.msra.mxu0 0.0
        %796 = vmatprep.subr.mxu0 0.0
        %797 = vmatpush1.msra.mxu0 0.0
        %798 = vmatprep.subr.mxu0 0.0
        %799 = vmatpush1.msra.mxu0 0.0
        %800 = vmatprep.subr.mxu0 0.0
        %801 = vmatpush1.msra.mxu0 0.0
        %802 = vmatprep.subr.mxu0 0.0
        %803 = vmatpush1.msra.mxu0 0.0
        %804 = vmatprep.subr.mxu0 0.0
        %805 = vmatpush1.msra.mxu0 0.0
        %806 = vmatprep.subr.mxu0 0.0
        %807 = vmatpush1.msra.mxu0 0.0
        %808 = vmatprep.subr.mxu0 0.0
        %809 = vmatpush1.msra.mxu0 0.0
        %810 = vmatprep.subr.mxu0 0.0
        %811 = vmatpush1.msra.mxu0 0.0
        %812 = vmatprep.subr.mxu0 0.0
        %813 = vmatpush1.msra.mxu0 0.0
        %814 = vmatprep.subr.mxu0 0.0
        %815 = vmatpush1.msra.mxu0 0.0
        %816 = vmatprep.subr.mxu0 0.0
        %817 = vmatpush1.msra.mxu0 0.0
        %818 = vmatprep.subr.mxu0 0.0
        %819 = vmatpush1.msra.mxu0 0.0
        %820 = vmatprep.subr.mxu0 0.0
        %821 = vmatpush1.msra.mxu0 0.0
        %822 = vmatprep.subr.mxu0 0.0
        %823 = vmatpush1.msra.mxu0 0.0
        %824 = vmatprep.subr.mxu0 0.0
        %825 = vmatpush1.msra.mxu0 0.0
        %826 = vmatprep.subr.mxu0 0.0
        %827 = vmatpush1.msra.mxu0 0.0
        %828 = vmatprep.subr.mxu0 0.0
        %829 = vmatpush1.msra.mxu0 0.0
        %830 = vmatprep.subr.mxu0 0.0
        %831 = vmatpush1.msra.mxu0 0.0
        %832 = vmatprep.subr.mxu0 0.0
        %833 = vmatpush1.msra.mxu0 0.0
        %834 = vmatprep.subr.mxu0 0.0
        %835 = vmatpush1.msra.mxu0 0.0
        %836 = vmatprep.subr.mxu0 0.0
        %837 = vmatpush1.msra.mxu0 0.0
        %838 = vmatprep.subr.mxu0 0.0
        %839 = vmatpush1.msra.mxu0 0.0
        %840 = vmatprep.subr.mxu0 0.0
        %841 = vmatpush1.msra.mxu0 0.0
        %842 = vmatprep.subr.mxu0 0.0
        %843 = vmatpush1.msra.mxu0 0.0
        %844 = vmatprep.subr.mxu0 0.0
        %845 = vmatpush1.msra.mxu0 0.0
        %846 = vmatprep.mubr.f32.mxu0 0.0
        %847 = vmatmul.mubr.f32.gmra.mrb[0].mxu0 %v780
        %v848 = vpop.f32.mrb[0].mxu0
        %v849 = vadd.f32 0.0, %v848
        %v850 = vpop.f32.mrb[0].mxu0
        %851 = vdwg.mxu0
        %852 = vrot.lane.b32.xlu0 %v596, 96
        %v853 = vpop.permute.xlu0 %852
        %v856 = vsel %vm601, %v775, 0
        %858 = vmatprep.subr.mxu0 0.0
        %859 = vmatpush1.msra.mxu0 %v853
        %860 = vmatprep.subr.mxu0 0.0
        %861 = vmatpush1.msra.mxu0 0.0
        %862 = vmatprep.subr.mxu0 0.0
        %863 = vmatpush1.msra.mxu0 0.0
        %864 = vmatprep.subr.mxu0 0.0
        %865 = vmatpush1.msra.mxu0 0.0
        %866 = vmatprep.subr.mxu0 0.0
        %867 = vmatpush1.msra.mxu0 0.0
        %868 = vmatprep.subr.mxu0 0.0
        %869 = vmatpush1.msra.mxu0 0.0
        %870 = vmatprep.subr.mxu0 0.0
        %871 = vmatpush1.msra.mxu0 0.0
        %872 = vmatprep.subr.mxu0 0.0
        %873 = vmatpush1.msra.mxu0 0.0
        %874 = vmatprep.subr.mxu0 0.0
        %875 = vmatpush1.msra.mxu0 0.0
        %876 = vmatprep.subr.mxu0 0.0
        %877 = vmatpush1.msra.mxu0 0.0
        %878 = vmatprep.subr.mxu0 0.0
        %879 = vmatpush1.msra.mxu0 0.0
        %880 = vmatprep.subr.mxu0 0.0
        %881 = vmatpush1.msra.mxu0 0.0
        %882 = vmatprep.subr.mxu0 0.0
        %883 = vmatpush1.msra.mxu0 0.0
        %884 = vmatprep.subr.mxu0 0.0
        %885 = vmatpush1.msra.mxu0 0.0
        %886 = vmatprep.subr.mxu0 0.0
        %887 = vmatpush1.msra.mxu0 0.0
        %888 = vmatprep.subr.mxu0 0.0
        %889 = vmatpush1.msra.mxu0 0.0
        %890 = vmatprep.subr.mxu0 0.0
        %891 = vmatpush1.msra.mxu0 0.0
        %892 = vmatprep.subr.mxu0 0.0
        %893 = vmatpush1.msra.mxu0 0.0
        %894 = vmatprep.subr.mxu0 0.0
        %895 = vmatpush1.msra.mxu0 0.0
        %896 = vmatprep.subr.mxu0 0.0
        %897 = vmatpush1.msra.mxu0 0.0
        %898 = vmatprep.subr.mxu0 0.0
        %899 = vmatpush1.msra.mxu0 0.0
        %900 = vmatprep.subr.mxu0 0.0
        %901 = vmatpush1.msra.mxu0 0.0
        %902 = vmatprep.subr.mxu0 0.0
        %903 = vmatpush1.msra.mxu0 0.0
        %904 = vmatprep.subr.mxu0 0.0
        %905 = vmatpush1.msra.mxu0 0.0
        %906 = vmatprep.subr.mxu0 0.0
        %907 = vmatpush1.msra.mxu0 0.0
        %908 = vmatprep.subr.mxu0 0.0
        %909 = vmatpush1.msra.mxu0 0.0
        %910 = vmatprep.subr.mxu0 0.0
        %911 = vmatpush1.msra.mxu0 0.0
        %912 = vmatprep.subr.mxu0 0.0
        %913 = vmatpush1.msra.mxu0 0.0
        %914 = vmatprep.subr.mxu0 0.0
        %915 = vmatpush1.msra.mxu0 0.0
        %916 = vmatprep.subr.mxu0 0.0
        %917 = vmatpush1.msra.mxu0 0.0
        %918 = vmatprep.subr.mxu0 0.0
        %919 = vmatpush1.msra.mxu0 0.0
        %920 = vmatprep.subr.mxu0 0.0
        %921 = vmatpush1.msra.mxu0 0.0
        %922 = vmatprep.mubr.f32.mxu0 0.0
        %923 = vmatmul.mubr.f32.gmra.mrb[0].mxu0 %v856
        %v924 = vpop.f32.mrb[0].mxu0
        %v925 = vadd.f32 0.0, %v924
        %v926 = vpop.f32.mrb[0].mxu0
        %927 = vdwg.mxu0
        %928 = vst.msk [vmem:[#allocation2] sm:$0xff] %vm601, %v849
        %929 = vst.msk [vmem:[#allocation2 + $0x8] sm:$0xff] %vm601, %v925
        %930 = vrot.lane.b32.xlu0 %v599, 120
        %v931 = vpop.permute.xlu0 %930
        %932 = vrot.lane.b32.xlu0 %v591, 120
        %v933 = vpop.permute.xlu0 %932
        %v934 = vsel %vm601, %v931, 0
        %v936 = vsel %vm601, %v933, 0
        %938 = vmatprep.subr.mxu0 0.0
        %939 = vmatpush1.xpose.msra.mxu0 %v936
        %940 = vmatprep.subr.mxu0 0.0
        %941 = vmatpush1.xpose.msra.mxu0 0.0
        %942 = vmatprep.subr.mxu0 0.0
        %943 = vmatpush1.xpose.msra.mxu0 0.0
        %944 = vmatprep.subr.mxu0 0.0
        %945 = vmatpush1.xpose.msra.mxu0 0.0
        %946 = vmatprep.subr.mxu0 0.0
        %947 = vmatpush1.xpose.msra.mxu0 0.0
        %948 = vmatprep.subr.mxu0 0.0
        %949 = vmatpush1.xpose.msra.mxu0 0.0
        %950 = vmatprep.subr.mxu0 0.0
        %951 = vmatpush1.xpose.msra.mxu0 0.0
        %952 = vmatprep.subr.mxu0 0.0
        %953 = vmatpush1.xpose.msra.mxu0 0.0
        %954 = vmatprep.subr.mxu0 0.0
        %955 = vmatpush1.xpose.msra.mxu0 0.0
        %956 = vmatprep.subr.mxu0 0.0
        %957 = vmatpush1.xpose.msra.mxu0 0.0
        %958 = vmatprep.subr.mxu0 0.0
        %959 = vmatpush1.xpose.msra.mxu0 0.0
        %960 = vmatprep.subr.mxu0 0.0
        %961 = vmatpush1.xpose.msra.mxu0 0.0
        %962 = vmatprep.subr.mxu0 0.0
        %963 = vmatpush1.xpose.msra.mxu0 0.0
        %964 = vmatprep.subr.mxu0 0.0
        %965 = vmatpush1.xpose.msra.mxu0 0.0
        %966 = vmatprep.subr.mxu0 0.0
        %967 = vmatpush1.xpose.msra.mxu0 0.0
        %968 = vmatprep.subr.mxu0 0.0
        %969 = vmatpush1.xpose.msra.mxu0 0.0
        %970 = vmatprep.subr.mxu0 0.0
        %971 = vmatpush1.xpose.msra.mxu0 0.0
        %972 = vmatprep.subr.mxu0 0.0
        %973 = vmatpush1.xpose.msra.mxu0 0.0
        %974 = vmatprep.subr.mxu0 0.0
        %975 = vmatpush1.xpose.msra.mxu0 0.0
        %976 = vmatprep.subr.mxu0 0.0
        %977 = vmatpush1.xpose.msra.mxu0 0.0
        %978 = vmatprep.subr.mxu0 0.0
        %979 = vmatpush1.xpose.msra.mxu0 0.0
        %980 = vmatprep.subr.mxu0 0.0
        %981 = vmatpush1.xpose.msra.mxu0 0.0
        %982 = vmatprep.subr.mxu0 0.0
        %983 = vmatpush1.xpose.msra.mxu0 0.0
        %984 = vmatprep.subr.mxu0 0.0
        %985 = vmatpush1.xpose.msra.mxu0 0.0
        %986 = vmatprep.subr.mxu0 0.0
        %987 = vmatpush1.xpose.msra.mxu0 0.0
        %988 = vmatprep.subr.mxu0 0.0
        %989 = vmatpush1.xpose.msra.mxu0 0.0
        %990 = vmatprep.subr.mxu0 0.0
        %991 = vmatpush1.xpose.msra.mxu0 0.0
        %992 = vmatprep.subr.mxu0 0.0
        %993 = vmatpush1.xpose.msra.mxu0 0.0
        %994 = vmatprep.subr.mxu0 0.0
        %995 = vmatpush1.xpose.msra.mxu0 0.0
        %996 = vmatprep.subr.mxu0 0.0
        %997 = vmatpush1.xpose.msra.mxu0 0.0
        %998 = vmatprep.subr.mxu0 0.0
        %999 = vmatpush1.xpose.msra.mxu0 0.0
        %1000 = vmatprep.subr.mxu0 0.0
        %1001 = vmatpush1.xpose.msra.mxu0 0.0
        %1002 = vmatprep.mubr.f32.mxu0 0.0
        %1003 = vmatmul.mubr.f32.gmra.mrb[0].mxu0 %v934
        %v1004 = vpop.f32.mrb[0].mxu0
        %v1005 = vadd.f32 0.0, %v1004
        %v1006 = vpop.f32.mrb[0].mxu0
        %1007 = vdwg.mxu0
        %1008 = vrot.lane.b32.xlu0 %v600, 120
        %v1009 = vpop.permute.xlu0 %1008
        %1010 = vrot.lane.b32.xlu0 %v596, 120
        %v1011 = vpop.permute.xlu0 %1010
        %v1012 = vsel %vm601, %v1009, 0
        %v1014 = vsel %vm601, %v1011, 0
        %1016 = vmatprep.subr.mxu0 0.0
        %1017 = vmatpush1.xpose.msra.mxu0 %v1014
        %1018 = vmatprep.subr.mxu0 0.0
        %1019 = vmatpush1.xpose.msra.mxu0 0.0
        %1020 = vmatprep.subr.mxu0 0.0
        %1021 = vmatpush1.xpose.msra.mxu0 0.0
        %1022 = vmatprep.subr.mxu0 0.0
        %1023 = vmatpush1.xpose.msra.mxu0 0.0
        %1024 = vmatprep.subr.mxu0 0.0
        %1025 = vmatpush1.xpose.msra.mxu0 0.0
        %1026 = vmatprep.subr.mxu0 0.0
        %1027 = vmatpush1.xpose.msra.mxu0 0.0
        %1028 = vmatprep.subr.mxu0 0.0
        %1029 = vmatpush1.xpose.msra.mxu0 0.0
        %1030 = vmatprep.subr.mxu0 0.0
        %1031 = vmatpush1.xpose.msra.mxu0 0.0
        %1032 = vmatprep.subr.mxu0 0.0
        %1033 = vmatpush1.xpose.msra.mxu0 0.0
        %1034 = vmatprep.subr.mxu0 0.0
        %1035 = vmatpush1.xpose.msra.mxu0 0.0
        %1036 = vmatprep.subr.mxu0 0.0
        %1037 = vmatpush1.xpose.msra.mxu0 0.0
        %1038 = vmatprep.subr.mxu0 0.0
        %1039 = vmatpush1.xpose.msra.mxu0 0.0
        %1040 = vmatprep.subr.mxu0 0.0
        %1041 = vmatpush1.xpose.msra.mxu0 0.0
        %1042 = vmatprep.subr.mxu0 0.0
        %1043 = vmatpush1.xpose.msra.mxu0 0.0
        %1044 = vmatprep.subr.mxu0 0.0
        %1045 = vmatpush1.xpose.msra.mxu0 0.0
        %1046 = vmatprep.subr.mxu0 0.0
        %1047 = vmatpush1.xpose.msra.mxu0 0.0
        %1048 = vmatprep.subr.mxu0 0.0
        %1049 = vmatpush1.xpose.msra.mxu0 0.0
        %1050 = vmatprep.subr.mxu0 0.0
        %1051 = vmatpush1.xpose.msra.mxu0 0.0
        %1052 = vmatprep.subr.mxu0 0.0
        %1053 = vmatpush1.xpose.msra.mxu0 0.0
        %1054 = vmatprep.subr.mxu0 0.0
        %1055 = vmatpush1.xpose.msra.mxu0 0.0
        %1056 = vmatprep.subr.mxu0 0.0
        %1057 = vmatpush1.xpose.msra.mxu0 0.0
        %1058 = vmatprep.subr.mxu0 0.0
        %1059 = vmatpush1.xpose.msra.mxu0 0.0
        %1060 = vmatprep.subr.mxu0 0.0
        %1061 = vmatpush1.xpose.msra.mxu0 0.0
        %1062 = vmatprep.subr.mxu0 0.0
        %1063 = vmatpush1.xpose.msra.mxu0 0.0
        %1064 = vmatprep.subr.mxu0 0.0
        %1065 = vmatpush1.xpose.msra.mxu0 0.0
        %1066 = vmatprep.subr.mxu0 0.0
        %1067 = vmatpush1.xpose.msra.mxu0 0.0
        %1068 = vmatprep.subr.mxu0 0.0
        %1069 = vmatpush1.xpose.msra.mxu0 0.0
        %1070 = vmatprep.subr.mxu0 0.0
        %1071 = vmatpush1.xpose.msra.mxu0 0.0
        %1072 = vmatprep.subr.mxu0 0.0
        %1073 = vmatpush1.xpose.msra.mxu0 0.0
        %1074 = vmatprep.subr.mxu0 0.0
        %1075 = vmatpush1.xpose.msra.mxu0 0.0
        %1076 = vmatprep.subr.mxu0 0.0
        %1077 = vmatpush1.xpose.msra.mxu0 0.0
        %1078 = vmatprep.subr.mxu0 0.0
        %1079 = vmatpush1.xpose.msra.mxu0 0.0
        %1080 = vmatprep.mubr.f32.mxu0 0.0
        %1081 = vmatmul.mubr.f32.gmra.mrb[0].mxu0 %v1012
        %v1082 = vpop.f32.mrb[0].mxu0
        %v1083 = vadd.f32 0.0, %v1082
        %v1084 = vpop.f32.mrb[0].mxu0
        %1085 = vdwg.mxu0
        %v1086 = vsel %vm601, %v1005, -inf
        %1087 = vmax.xlane.f32.xlu0 %v1086
        %v1088 = vpop.xlane.xlu0 %1087
        %v1089 = vsel %vm601, %v1083, -inf
        %1090 = vmax.xlane.f32.xlu0 %v1089
        %v1091 = vpop.xlane.xlu0 %1090
        %v1092 = vsub.f32 %v1005, %v1088
        %v1093 = vsub.f32 %v1083, %v1091
        %v1094 = vmul.f32 %v1092, 1.442695
        %v1095 = vpow.pop %v1094
        %v1096 = vmul.f32 %v1093, 1.442695
        %v1097 = vpow.pop %v1096
        %v1098 = vsel %vm601, %v1095, 0.0
        %1099 = vadd.xlane.f32.xlu0 %v1098
        %v1100 = vpop.xlane.xlu0 %1099
        %v1101 = vsel %vm601, %v1097, 0.0
        %1102 = vadd.xlane.f32.xlu0 %v1101
        %v1103 = vpop.xlane.xlu0 %1102
        %v1104 = vrcp.pop %v1100
        %v1105 = vrcp.pop %v1103
        %v1106 = vmul.f32 %v1095, %v1104
        %v1107 = vmul.f32 %v1097, %v1105
        %1108 = vrot.lane.b32.xlu0 %v591, 88
        %v1109 = vpop.permute.xlu0 %1108
        %v1112 = vsel %vm601, %v1106, 0
        %1114 = vmatprep.subr.mxu0 0.0
        %1115 = vmatpush1.msra.mxu0 %v1109
        %1116 = vmatprep.subr.mxu0 0.0
        %1117 = vmatpush1.msra.mxu0 0.0
        %1118 = vmatprep.subr.mxu0 0.0
        %1119 = vmatpush1.msra.mxu0 0.0
        %1120 = vmatprep.subr.mxu0 0.0
        %1121 = vmatpush1.msra.mxu0 0.0
        %1122 = vmatprep.subr.mxu0 0.0
        %1123 = vmatpush1.msra.mxu0 0.0
        %1124 = vmatprep.subr.mxu0 0.0
        %1125 = vmatpush1.msra.mxu0 0.0
        %1126 = vmatprep.subr.mxu0 0.0
        %1127 = vmatpush1.msra.mxu0 0.0
        %1128 = vmatprep.subr.mxu0 0.0
        %1129 = vmatpush1.msra.mxu0 0.0
        %1130 = vmatprep.subr.mxu0 0.0
        %1131 = vmatpush1.msra.mxu0 0.0
        %1132 = vmatprep.subr.mxu0 0.0
        %1133 = vmatpush1.msra.mxu0 0.0
        %1134 = vmatprep.subr.mxu0 0.0
        %1135 = vmatpush1.msra.mxu0 0.0
        %1136 = vmatprep.subr.mxu0 0.0
        %1137 = vmatpush1.msra.mxu0 0.0
        %1138 = vmatprep.subr.mxu0 0.0
        %1139 = vmatpush1.msra.mxu0 0.0
        %1140 = vmatprep.subr.mxu0 0.0
        %1141 = vmatpush1.msra.mxu0 0.0
        %1142 = vmatprep.subr.mxu0 0.0
        %1143 = vmatpush1.msra.mxu0 0.0
        %1144 = vmatprep.subr.mxu0 0.0
        %1145 = vmatpush1.msra.mxu0 0.0
        %1146 = vmatprep.subr.mxu0 0.0
        %1147 = vmatpush1.msra.mxu0 0.0
        %1148 = vmatprep.subr.mxu0 0.0
        %1149 = vmatpush1.msra.mxu0 0.0
        %1150 = vmatprep.subr.mxu0 0.0
        %1151 = vmatpush1.msra.mxu0 0.0
        %1152 = vmatprep.subr.mxu0 0.0
        %1153 = vmatpush1.msra.mxu0 0.0
        %1154 = vmatprep.subr.mxu0 0.0
        %1155 = vmatpush1.msra.mxu0 0.0
        %1156 = vmatprep.subr.mxu0 0.0
        %1157 = vmatpush1.msra.mxu0 0.0
        %1158 = vmatprep.subr.mxu0 0.0
        %1159 = vmatpush1.msra.mxu0 0.0
        %1160 = vmatprep.subr.mxu0 0.0
        %1161 = vmatpush1.msra.mxu0 0.0
        %1162 = vmatprep.subr.mxu0 0.0
        %1163 = vmatpush1.msra.mxu0 0.0
        %1164 = vmatprep.subr.mxu0 0.0
        %1165 = vmatpush1.msra.mxu0 0.0
        %1166 = vmatprep.subr.mxu0 0.0
        %1167 = vmatpush1.msra.mxu0 0.0
        %1168 = vmatprep.subr.mxu0 0.0
        %1169 = vmatpush1.msra.mxu0 0.0
        %1170 = vmatprep.subr.mxu0 0.0
        %1171 = vmatpush1.msra.mxu0 0.0
        %1172 = vmatprep.subr.mxu0 0.0
        %1173 = vmatpush1.msra.mxu0 0.0
        %1174 = vmatprep.subr.mxu0 0.0
        %1175 = vmatpush1.msra.mxu0 0.0
        %1176 = vmatprep.subr.mxu0 0.0
        %1177 = vmatpush1.msra.mxu0 0.0
        %1178 = vmatprep.mubr.f32.mxu0 0.0
        %1179 = vmatmul.mubr.f32.gmra.mrb[0].mxu0 %v1112
        %v1180 = vpop.f32.mrb[0].mxu0
        %v1181 = vadd.f32 0.0, %v1180
        %v1182 = vpop.f32.mrb[0].mxu0
        %1183 = vdwg.mxu0
        %1184 = vrot.lane.b32.xlu0 %v596, 88
        %v1185 = vpop.permute.xlu0 %1184
        %v1188 = vsel %vm601, %v1107, 0
        %1190 = vmatprep.subr.mxu0 0.0
        %1191 = vmatpush1.msra.mxu0 %v1185
        %1192 = vmatprep.subr.mxu0 0.0
        %1193 = vmatpush1.msra.mxu0 0.0
        %1194 = vmatprep.subr.mxu0 0.0
        %1195 = vmatpush1.msra.mxu0 0.0
        %1196 = vmatprep.subr.mxu0 0.0
        %1197 = vmatpush1.msra.mxu0 0.0
        %1198 = vmatprep.subr.mxu0 0.0
        %1199 = vmatpush1.msra.mxu0 0.0
        %1200 = vmatprep.subr.mxu0 0.0
        %1201 = vmatpush1.msra.mxu0 0.0
        %1202 = vmatprep.subr.mxu0 0.0
        %1203 = vmatpush1.msra.mxu0 0.0
        %1204 = vmatprep.subr.mxu0 0.0
        %1205 = vmatpush1.msra.mxu0 0.0
        %1206 = vmatprep.subr.mxu0 0.0
        %1207 = vmatpush1.msra.mxu0 0.0
        %1208 = vmatprep.subr.mxu0 0.0
        %1209 = vmatpush1.msra.mxu0 0.0
        %1210 = vmatprep.subr.mxu0 0.0
        %1211 = vmatpush1.msra.mxu0 0.0
        %1212 = vmatprep.subr.mxu0 0.0
        %1213 = vmatpush1.msra.mxu0 0.0
        %1214 = vmatprep.subr.mxu0 0.0
        %1215 = vmatpush1.msra.mxu0 0.0
        %1216 = vmatprep.subr.mxu0 0.0
        %1217 = vmatpush1.msra.mxu0 0.0
        %1218 = vmatprep.subr.mxu0 0.0
        %1219 = vmatpush1.msra.mxu0 0.0
        %1220 = vmatprep.subr.mxu0 0.0
        %1221 = vmatpush1.msra.mxu0 0.0
        %1222 = vmatprep.subr.mxu0 0.0
        %1223 = vmatpush1.msra.mxu0 0.0
        %1224 = vmatprep.subr.mxu0 0.0
        %1225 = vmatpush1.msra.mxu0 0.0
        %1226 = vmatprep.subr.mxu0 0.0
        %1227 = vmatpush1.msra.mxu0 0.0
        %1228 = vmatprep.subr.mxu0 0.0
        %1229 = vmatpush1.msra.mxu0 0.0
        %1230 = vmatprep.subr.mxu0 0.0
        %1231 = vmatpush1.msra.mxu0 0.0
        %1232 = vmatprep.subr.mxu0 0.0
        %1233 = vmatpush1.msra.mxu0 0.0
        %1234 = vmatprep.subr.mxu0 0.0
        %1235 = vmatpush1.msra.mxu0 0.0
        %1236 = vmatprep.subr.mxu0 0.0
        %1237 = vmatpush1.msra.mxu0 0.0
        %1238 = vmatprep.subr.mxu0 0.0
        %1239 = vmatpush1.msra.mxu0 0.0
        %1240 = vmatprep.subr.mxu0 0.0
        %1241 = vmatpush1.msra.mxu0 0.0
        %1242 = vmatprep.subr.mxu0 0.0
        %1243 = vmatpush1.msra.mxu0 0.0
        %1244 = vmatprep.subr.mxu0 0.0
        %1245 = vmatpush1.msra.mxu0 0.0
        %1246 = vmatprep.subr.mxu0 0.0
        %1247 = vmatpush1.msra.mxu0 0.0
        %1248 = vmatprep.subr.mxu0 0.0
        %1249 = vmatpush1.msra.mxu0 0.0
        %1250 = vmatprep.subr.mxu0 0.0
        %1251 = vmatpush1.msra.mxu0 0.0
        %1252 = vmatprep.subr.mxu0 0.0
        %1253 = vmatpush1.msra.mxu0 0.0
        %1254 = vmatprep.mubr.f32.mxu0 0.0
        %1255 = vmatmul.mubr.f32.gmra.mrb[0].mxu0 %v1188
        %v1256 = vpop.f32.mrb[0].mxu0
        %v1257 = vadd.f32 0.0, %v1256
        %v1258 = vpop.f32.mrb[0].mxu0
        %1259 = vdwg.mxu0
        %1262 = vrot.lane.b32.xlu0 %v1181, 8
        %v1263 = vpop.permute.xlu0 %1262
        %1264 = vrot.lane.b32.xlu0 %v1257, 8
        %v1265 = vpop.permute.xlu0 %1264
        %vm1268 = vcmask 130112
        %1269 = vst.msk [vmem:[#allocation2] sm:$0xff] %vm1268, %v1263
        %1270 = vst.msk [vmem:[#allocation2 + $0x8] sm:$0xff] %vm1268, %v1265
        %1271 = vrot.lane.b32.xlu0 %v599, 112
        %v1272 = vpop.permute.xlu0 %1271
        %1273 = vrot.lane.b32.xlu0 %v591, 112
        %v1274 = vpop.permute.xlu0 %1273
        %v1275 = vsel %vm601, %v1272, 0
        %v1277 = vsel %vm601, %v1274, 0
        %1279 = vmatprep.subr.mxu0 0.0
        %1280 = vmatpush1.xpose.msra.mxu0 %v1277
        %1281 = vmatprep.subr.mxu0 0.0
        %1282 = vmatpush1.xpose.msra.mxu0 0.0
        %1283 = vmatprep.subr.mxu0 0.0
        %1284 = vmatpush1.xpose.msra.mxu0 0.0
        %1285 = vmatprep.subr.mxu0 0.0
        %1286 = vmatpush1.xpose.msra.mxu0 0.0
        %1287 = vmatprep.subr.mxu0 0.0
        %1288 = vmatpush1.xpose.msra.mxu0 0.0
        %1289 = vmatprep.subr.mxu0 0.0
        %1290 = vmatpush1.xpose.msra.mxu0 0.0
        %1291 = vmatprep.subr.mxu0 0.0
        %1292 = vmatpush1.xpose.msra.mxu0 0.0
        %1293 = vmatprep.subr.mxu0 0.0
        %1294 = vmatpush1.xpose.msra.mxu0 0.0
        %1295 = vmatprep.subr.mxu0 0.0
        %1296 = vmatpush1.xpose.msra.mxu0 0.0
        %1297 = vmatprep.subr.mxu0 0.0
        %1298 = vmatpush1.xpose.msra.mxu0 0.0
        %1299 = vmatprep.subr.mxu0 0.0
        %1300 = vmatpush1.xpose.msra.mxu0 0.0
        %1301 = vmatprep.subr.mxu0 0.0
        %1302 = vmatpush1.xpose.msra.mxu0 0.0
        %1303 = vmatprep.subr.mxu0 0.0
        %1304 = vmatpush1.xpose.msra.mxu0 0.0
        %1305 = vmatprep.subr.mxu0 0.0
        %1306 = vmatpush1.xpose.msra.mxu0 0.0
        %1307 = vmatprep.subr.mxu0 0.0
        %1308 = vmatpush1.xpose.msra.mxu0 0.0
        %1309 = vmatprep.subr.mxu0 0.0
        %1310 = vmatpush1.xpose.msra.mxu0 0.0
        %1311 = vmatprep.subr.mxu0 0.0
        %1312 = vmatpush1.xpose.msra.mxu0 0.0
        %1313 = vmatprep.subr.mxu0 0.0
        %1314 = vmatpush1.xpose.msra.mxu0 0.0
        %1315 = vmatprep.subr.mxu0 0.0
        %1316 = vmatpush1.xpose.msra.mxu0 0.0
        %1317 = vmatprep.subr.mxu0 0.0
        %1318 = vmatpush1.xpose.msra.mxu0 0.0
        %1319 = vmatprep.subr.mxu0 0.0
        %1320 = vmatpush1.xpose.msra.mxu0 0.0
        %1321 = vmatprep.subr.mxu0 0.0
        %1322 = vmatpush1.xpose.msra.mxu0 0.0
        %1323 = vmatprep.subr.mxu0 0.0
        %1324 = vmatpush1.xpose.msra.mxu0 0.0
        %1325 = vmatprep.subr.mxu0 0.0
        %1326 = vmatpush1.xpose.msra.mxu0 0.0
        %1327 = vmatprep.subr.mxu0 0.0
        %1328 = vmatpush1.xpose.msra.mxu0 0.0
        %1329 = vmatprep.subr.mxu0 0.0
        %1330 = vmatpush1.xpose.msra.mxu0 0.0
        %1331 = vmatprep.subr.mxu0 0.0
        %1332 = vmatpush1.xpose.msra.mxu0 0.0
        %1333 = vmatprep.subr.mxu0 0.0
        %1334 = vmatpush1.xpose.msra.mxu0 0.0
        %1335 = vmatprep.subr.mxu0 0.0
        %1336 = vmatpush1.xpose.msra.mxu0 0.0
        %1337 = vmatprep.subr.mxu0 0.0
        %1338 = vmatpush1.xpose.msra.mxu0 0.0
        %1339 = vmatprep.subr.mxu0 0.0
        %1340 = vmatpush1.xpose.msra.mxu0 0.0
        %1341 = vmatprep.subr.mxu0 0.0
        %1342 = vmatpush1.xpose.msra.mxu0 0.0
        %1343 = vmatprep.mubr.f32.mxu0 0.0
        %1344 = vmatmul.mubr.f32.gmra.mrb[0].mxu0 %v1275
        %v1345 = vpop.f32.mrb[0].mxu0
        %v1346 = vadd.f32 0.0, %v1345
        %v1347 = vpop.f32.mrb[0].mxu0
        %1348 = vdwg.mxu0
        %1349 = vrot.lane.b32.xlu0 %v600, 112
        %v1350 = vpop.permute.xlu0 %1349
        %1351 = vrot.lane.b32.xlu0 %v596, 112
        %v1352 = vpop.permute.xlu0 %1351
        %v1353 = vsel %vm601, %v1350, 0
        %v1355 = vsel %vm601, %v1352, 0
        %1357 = vmatprep.subr.mxu0 0.0
        %1358 = vmatpush1.xpose.msra.mxu0 %v1355
        %1359 = vmatprep.subr.mxu0 0.0
        %1360 = vmatpush1.xpose.msra.mxu0 0.0
        %1361 = vmatprep.subr.mxu0 0.0
        %1362 = vmatpush1.xpose.msra.mxu0 0.0
        %1363 = vmatprep.subr.mxu0 0.0
        %1364 = vmatpush1.xpose.msra.mxu0 0.0
        %1365 = vmatprep.subr.mxu0 0.0
        %1366 = vmatpush1.xpose.msra.mxu0 0.0
        %1367 = vmatprep.subr.mxu0 0.0
        %1368 = vmatpush1.xpose.msra.mxu0 0.0
        %1369 = vmatprep.subr.mxu0 0.0
        %1370 = vmatpush1.xpose.msra.mxu0 0.0
        %1371 = vmatprep.subr.mxu0 0.0
        %1372 = vmatpush1.xpose.msra.mxu0 0.0
        %1373 = vmatprep.subr.mxu0 0.0
        %1374 = vmatpush1.xpose.msra.mxu0 0.0
        %1375 = vmatprep.subr.mxu0 0.0
        %1376 = vmatpush1.xpose.msra.mxu0 0.0
        %1377 = vmatprep.subr.mxu0 0.0
        %1378 = vmatpush1.xpose.msra.mxu0 0.0
        %1379 = vmatprep.subr.mxu0 0.0
        %1380 = vmatpush1.xpose.msra.mxu0 0.0
        %1381 = vmatprep.subr.mxu0 0.0
        %1382 = vmatpush1.xpose.msra.mxu0 0.0
        %1383 = vmatprep.subr.mxu0 0.0
        %1384 = vmatpush1.xpose.msra.mxu0 0.0
        %1385 = vmatprep.subr.mxu0 0.0
        %1386 = vmatpush1.xpose.msra.mxu0 0.0
        %1387 = vmatprep.subr.mxu0 0.0
        %1388 = vmatpush1.xpose.msra.mxu0 0.0
        %1389 = vmatprep.subr.mxu0 0.0
        %1390 = vmatpush1.xpose.msra.mxu0 0.0
        %1391 = vmatprep.subr.mxu0 0.0
        %1392 = vmatpush1.xpose.msra.mxu0 0.0
        %1393 = vmatprep.subr.mxu0 0.0
        %1394 = vmatpush1.xpose.msra.mxu0 0.0
        %1395 = vmatprep.subr.mxu0 0.0
        %1396 = vmatpush1.xpose.msra.mxu0 0.0
        %1397 = vmatprep.subr.mxu0 0.0
        %1398 = vmatpush1.xpose.msra.mxu0 0.0
        %1399 = vmatprep.subr.mxu0 0.0
        %1400 = vmatpush1.xpose.msra.mxu0 0.0
        %1401 = vmatprep.subr.mxu0 0.0
        %1402 = vmatpush1.xpose.msra.mxu0 0.0
        %1403 = vmatprep.subr.mxu0 0.0
        %1404 = vmatpush1.xpose.msra.mxu0 0.0
        %1405 = vmatprep.subr.mxu0 0.0
        %1406 = vmatpush1.xpose.msra.mxu0 0.0
        %1407 = vmatprep.subr.mxu0 0.0
        %1408 = vmatpush1.xpose.msra.mxu0 0.0
        %1409 = vmatprep.subr.mxu0 0.0
        %1410 = vmatpush1.xpose.msra.mxu0 0.0
        %1411 = vmatprep.subr.mxu0 0.0
        %1412 = vmatpush1.xpose.msra.mxu0 0.0
        %1413 = vmatprep.subr.mxu0 0.0
        %1414 = vmatpush1.xpose.msra.mxu0 0.0
        %1415 = vmatprep.subr.mxu0 0.0
        %1416 = vmatpush1.xpose.msra.mxu0 0.0
        %1417 = vmatprep.subr.mxu0 0.0
        %1418 = vmatpush1.xpose.msra.mxu0 0.0
        %1419 = vmatprep.subr.mxu0 0.0
        %1420 = vmatpush1.xpose.msra.mxu0 0.0
        %1421 = vmatprep.mubr.f32.mxu0 0.0
        %1422 = vmatmul.mubr.f32.gmra.mrb[0].mxu0 %v1353
        %v1423 = vpop.f32.mrb[0].mxu0
        %v1424 = vadd.f32 0.0, %v1423
        %v1425 = vpop.f32.mrb[0].mxu0
        %1426 = vdwg.mxu0
        %v1427 = vsel %vm601, %v1346, -inf
        %1428 = vmax.xlane.f32.xlu0 %v1427
        %v1429 = vpop.xlane.xlu0 %1428
        %v1430 = vsel %vm601, %v1424, -inf
        %1431 = vmax.xlane.f32.xlu0 %v1430
        %v1432 = vpop.xlane.xlu0 %1431
        %v1433 = vsub.f32 %v1346, %v1429
        %v1434 = vsub.f32 %v1424, %v1432
        %v1435 = vmul.f32 %v1433, 1.442695
        %v1436 = vpow.pop %v1435
        %v1437 = vmul.f32 %v1434, 1.442695
        %v1438 = vpow.pop %v1437
        %v1439 = vsel %vm601, %v1436, 0.0
        %1440 = vadd.xlane.f32.xlu0 %v1439
        %v1441 = vpop.xlane.xlu0 %1440
        %v1442 = vsel %vm601, %v1438, 0.0
        %1443 = vadd.xlane.f32.xlu0 %v1442
        %v1444 = vpop.xlane.xlu0 %1443
        %v1445 = vrcp.pop %v1441
        %v1446 = vrcp.pop %v1444
        %v1447 = vmul.f32 %v1436, %v1445
        %v1448 = vmul.f32 %v1438, %v1446
        %1449 = vrot.lane.b32.xlu0 %v591, 80
        %v1450 = vpop.permute.xlu0 %1449
        %v1453 = vsel %vm601, %v1447, 0
        %1455 = vmatprep.subr.mxu0 0.0
        %1456 = vmatpush1.msra.mxu0 %v1450
        %1457 = vmatprep.subr.mxu0 0.0
        %1458 = vmatpush1.msra.mxu0 0.0
        %1459 = vmatprep.subr.mxu0 0.0
        %1460 = vmatpush1.msra.mxu0 0.0
        %1461 = vmatprep.subr.mxu0 0.0
        %1462 = vmatpush1.msra.mxu0 0.0
        %1463 = vmatprep.subr.mxu0 0.0
        %1464 = vmatpush1.msra.mxu0 0.0
        %1465 = vmatprep.subr.mxu0 0.0
        %1466 = vmatpush1.msra.mxu0 0.0
        %1467 = vmatprep.subr.mxu0 0.0
        %1468 = vmatpush1.msra.mxu0 0.0
        %1469 = vmatprep.subr.mxu0 0.0
        %1470 = vmatpush1.msra.mxu0 0.0
        %1471 = vmatprep.subr.mxu0 0.0
        %1472 = vmatpush1.msra.mxu0 0.0
        %1473 = vmatprep.subr.mxu0 0.0
        %1474 = vmatpush1.msra.mxu0 0.0
        %1475 = vmatprep.subr.mxu0 0.0
        %1476 = vmatpush1.msra.mxu0 0.0
        %1477 = vmatprep.subr.mxu0 0.0
        %1478 = vmatpush1.msra.mxu0 0.0
        %1479 = vmatprep.subr.mxu0 0.0
        %1480 = vmatpush1.msra.mxu0 0.0
        %1481 = vmatprep.subr.mxu0 0.0
        %1482 = vmatpush1.msra.mxu0 0.0
        %1483 = vmatprep.subr.mxu0 0.0
        %1484 = vmatpush1.msra.mxu0 0.0
        %1485 = vmatprep.subr.mxu0 0.0
        %1486 = vmatpush1.msra.mxu0 0.0
        %1487 = vmatprep.subr.mxu0 0.0
        %1488 = vmatpush1.msra.mxu0 0.0
        %1489 = vmatprep.subr.mxu0 0.0
        %1490 = vmatpush1.msra.mxu0 0.0
        %1491 = vmatprep.subr.mxu0 0.0
        %1492 = vmatpush1.msra.mxu0 0.0
        %1493 = vmatprep.subr.mxu0 0.0
        %1494 = vmatpush1.msra.mxu0 0.0
        %1495 = vmatprep.subr.mxu0 0.0
        %1496 = vmatpush1.msra.mxu0 0.0
        %1497 = vmatprep.subr.mxu0 0.0
        %1498 = vmatpush1.msra.mxu0 0.0
        %1499 = vmatprep.subr.mxu0 0.0
        %1500 = vmatpush1.msra.mxu0 0.0
        %1501 = vmatprep.subr.mxu0 0.0
        %1502 = vmatpush1.msra.mxu0 0.0
        %1503 = vmatprep.subr.mxu0 0.0
        %1504 = vmatpush1.msra.mxu0 0.0
        %1505 = vmatprep.subr.mxu0 0.0
        %1506 = vmatpush1.msra.mxu0 0.0
        %1507 = vmatprep.subr.mxu0 0.0
        %1508 = vmatpush1.msra.mxu0 0.0
        %1509 = vmatprep.subr.mxu0 0.0
        %1510 = vmatpush1.msra.mxu0 0.0
        %1511 = vmatprep.subr.mxu0 0.0
        %1512 = vmatpush1.msra.mxu0 0.0
        %1513 = vmatprep.subr.mxu0 0.0
        %1514 = vmatpush1.msra.mxu0 0.0
        %1515 = vmatprep.subr.mxu0 0.0
        %1516 = vmatpush1.msra.mxu0 0.0
        %1517 = vmatprep.subr.mxu0 0.0
        %1518 = vmatpush1.msra.mxu0 0.0
        %1519 = vmatprep.mubr.f32.mxu0 0.0
        %1520 = vmatmul.mubr.f32.gmra.mrb[0].mxu0 %v1453
        %v1521 = vpop.f32.mrb[0].mxu0
        %v1522 = vadd.f32 0.0, %v1521
        %v1523 = vpop.f32.mrb[0].mxu0
        %1524 = vdwg.mxu0
        %1525 = vrot.lane.b32.xlu0 %v596, 80
        %v1526 = vpop.permute.xlu0 %1525
        %v1529 = vsel %vm601, %v1448, 0
        %1531 = vmatprep.subr.mxu0 0.0
        %1532 = vmatpush1.msra.mxu0 %v1526
        %1533 = vmatprep.subr.mxu0 0.0
        %1534 = vmatpush1.msra.mxu0 0.0
        %1535 = vmatprep.subr.mxu0 0.0
        %1536 = vmatpush1.msra.mxu0 0.0
        %1537 = vmatprep.subr.mxu0 0.0
        %1538 = vmatpush1.msra.mxu0 0.0
        %1539 = vmatprep.subr.mxu0 0.0
        %1540 = vmatpush1.msra.mxu0 0.0
        %1541 = vmatprep.subr.mxu0 0.0
        %1542 = vmatpush1.msra.mxu0 0.0
        %1543 = vmatprep.subr.mxu0 0.0
        %1544 = vmatpush1.msra.mxu0 0.0
        %1545 = vmatprep.subr.mxu0 0.0
        %1546 = vmatpush1.msra.mxu0 0.0
        %1547 = vmatprep.subr.mxu0 0.0
        %1548 = vmatpush1.msra.mxu0 0.0
        %1549 = vmatprep.subr.mxu0 0.0
        %1550 = vmatpush1.msra.mxu0 0.0
        %1551 = vmatprep.subr.mxu0 0.0
        %1552 = vmatpush1.msra.mxu0 0.0
        %1553 = vmatprep.subr.mxu0 0.0
        %1554 = vmatpush1.msra.mxu0 0.0
        %1555 = vmatprep.subr.mxu0 0.0
        %1556 = vmatpush1.msra.mxu0 0.0
        %1557 = vmatprep.subr.mxu0 0.0
        %1558 = vmatpush1.msra.mxu0 0.0
        %1559 = vmatprep.subr.mxu0 0.0
        %1560 = vmatpush1.msra.mxu0 0.0
        %1561 = vmatprep.subr.mxu0 0.0
        %1562 = vmatpush1.msra.mxu0 0.0
        %1563 = vmatprep.subr.mxu0 0.0
        %1564 = vmatpush1.msra.mxu0 0.0
        %1565 = vmatprep.subr.mxu0 0.0
        %1566 = vmatpush1.msra.mxu0 0.0
        %1567 = vmatprep.subr.mxu0 0.0
        %1568 = vmatpush1.msra.mxu0 0.0
        %1569 = vmatprep.subr.mxu0 0.0
        %1570 = vmatpush1.msra.mxu0 0.0
        %1571 = vmatprep.subr.mxu0 0.0
        %1572 = vmatpush1.msra.mxu0 0.0
        %1573 = vmatprep.subr.mxu0 0.0
        %1574 = vmatpush1.msra.mxu0 0.0
        %1575 = vmatprep.subr.mxu0 0.0
        %1576 = vmatpush1.msra.mxu0 0.0
        %1577 = vmatprep.subr.mxu0 0.0
        %1578 = vmatpush1.msra.mxu0 0.0
        %1579 = vmatprep.subr.mxu0 0.0
        %1580 = vmatpush1.msra.mxu0 0.0
        %1581 = vmatprep.subr.mxu0 0.0
        %1582 = vmatpush1.msra.mxu0 0.0
        %1583 = vmatprep.subr.mxu0 0.0
        %1584 = vmatpush1.msra.mxu0 0.0
        %1585 = vmatprep.subr.mxu0 0.0
        %1586 = vmatpush1.msra.mxu0 0.0
        %1587 = vmatprep.subr.mxu0 0.0
        %1588 = vmatpush1.msra.mxu0 0.0
        %1589 = vmatprep.subr.mxu0 0.0
        %1590 = vmatpush1.msra.mxu0 0.0
        %1591 = vmatprep.subr.mxu0 0.0
        %1592 = vmatpush1.msra.mxu0 0.0
        %1593 = vmatprep.subr.mxu0 0.0
        %1594 = vmatpush1.msra.mxu0 0.0
        %1595 = vmatprep.mubr.f32.mxu0 0.0
        %1596 = vmatmul.mubr.f32.gmra.mrb[0].mxu0 %v1529
        %v1597 = vpop.f32.mrb[0].mxu0
        %v1598 = vadd.f32 0.0, %v1597
        %v1599 = vpop.f32.mrb[0].mxu0
        %1600 = vdwg.mxu0
        %1603 = vrot.lane.b32.xlu0 %v1522, 16
        %v1604 = vpop.permute.xlu0 %1603
        %1605 = vrot.lane.b32.xlu0 %v1598, 16
        %v1606 = vpop.permute.xlu0 %1605
        %vm1609 = vcmask 195712
        %1610 = vst.msk [vmem:[#allocation2] sm:$0xff] %vm1609, %v1604
        %1611 = vst.msk [vmem:[#allocation2 + $0x8] sm:$0xff] %vm1609, %v1606
        %1612 = vrot.lane.b32.xlu0 %v599, 104
        %v1613 = vpop.permute.xlu0 %1612
        %1614 = vrot.lane.b32.xlu0 %v591, 104
        %v1615 = vpop.permute.xlu0 %1614
        %v1616 = vsel %vm601, %v1613, 0
        %v1618 = vsel %vm601, %v1615, 0
        %1620 = vmatprep.subr.mxu0 0.0
        %1621 = vmatpush1.xpose.msra.mxu0 %v1618
        %1622 = vmatprep.subr.mxu0 0.0
        %1623 = vmatpush1.xpose.msra.mxu0 0.0
        %1624 = vmatprep.subr.mxu0 0.0
        %1625 = vmatpush1.xpose.msra.mxu0 0.0
        %1626 = vmatprep.subr.mxu0 0.0
        %1627 = vmatpush1.xpose.msra.mxu0 0.0
        %1628 = vmatprep.subr.mxu0 0.0
        %1629 = vmatpush1.xpose.msra.mxu0 0.0
        %1630 = vmatprep.subr.mxu0 0.0
        %1631 = vmatpush1.xpose.msra.mxu0 0.0
        %1632 = vmatprep.subr.mxu0 0.0
        %1633 = vmatpush1.xpose.msra.mxu0 0.0
        %1634 = vmatprep.subr.mxu0 0.0
        %1635 = vmatpush1.xpose.msra.mxu0 0.0
        %1636 = vmatprep.subr.mxu0 0.0
        %1637 = vmatpush1.xpose.msra.mxu0 0.0
        %1638 = vmatprep.subr.mxu0 0.0
        %1639 = vmatpush1.xpose.msra.mxu0 0.0
        %1640 = vmatprep.subr.mxu0 0.0
        %1641 = vmatpush1.xpose.msra.mxu0 0.0
        %1642 = vmatprep.subr.mxu0 0.0
        %1643 = vmatpush1.xpose.msra.mxu0 0.0
        %1644 = vmatprep.subr.mxu0 0.0
        %1645 = vmatpush1.xpose.msra.mxu0 0.0
        %1646 = vmatprep.subr.mxu0 0.0
        %1647 = vmatpush1.xpose.msra.mxu0 0.0
        %1648 = vmatprep.subr.mxu0 0.0
        %1649 = vmatpush1.xpose.msra.mxu0 0.0
        %1650 = vmatprep.subr.mxu0 0.0
        %1651 = vmatpush1.xpose.msra.mxu0 0.0
        %1652 = vmatprep.subr.mxu0 0.0
        %1653 = vmatpush1.xpose.msra.mxu0 0.0
        %1654 = vmatprep.subr.mxu0 0.0
        %1655 = vmatpush1.xpose.msra.mxu0 0.0
        %1656 = vmatprep.subr.mxu0 0.0
        %1657 = vmatpush1.xpose.msra.mxu0 0.0
        %1658 = vmatprep.subr.mxu0 0.0
        %1659 = vmatpush1.xpose.msra.mxu0 0.0
        %1660 = vmatprep.subr.mxu0 0.0
        %1661 = vmatpush1.xpose.msra.mxu0 0.0
        %1662 = vmatprep.subr.mxu0 0.0
        %1663 = vmatpush1.xpose.msra.mxu0 0.0
        %1664 = vmatprep.subr.mxu0 0.0
        %1665 = vmatpush1.xpose.msra.mxu0 0.0
        %1666 = vmatprep.subr.mxu0 0.0
        %1667 = vmatpush1.xpose.msra.mxu0 0.0
        %1668 = vmatprep.subr.mxu0 0.0
        %1669 = vmatpush1.xpose.msra.mxu0 0.0
        %1670 = vmatprep.subr.mxu0 0.0
        %1671 = vmatpush1.xpose.msra.mxu0 0.0
        %1672 = vmatprep.subr.mxu0 0.0
        %1673 = vmatpush1.xpose.msra.mxu0 0.0
        %1674 = vmatprep.subr.mxu0 0.0
        %1675 = vmatpush1.xpose.msra.mxu0 0.0
        %1676 = vmatprep.subr.mxu0 0.0
        %1677 = vmatpush1.xpose.msra.mxu0 0.0
        %1678 = vmatprep.subr.mxu0 0.0
        %1679 = vmatpush1.xpose.msra.mxu0 0.0
        %1680 = vmatprep.subr.mxu0 0.0
        %1681 = vmatpush1.xpose.msra.mxu0 0.0
        %1682 = vmatprep.subr.mxu0 0.0
        %1683 = vmatpush1.xpose.msra.mxu0 0.0
        %1684 = vmatprep.mubr.f32.mxu0 0.0
        %1685 = vmatmul.mubr.f32.gmra.mrb[0].mxu0 %v1616
        %v1686 = vpop.f32.mrb[0].mxu0
        %v1687 = vadd.f32 0.0, %v1686
        %v1688 = vpop.f32.mrb[0].mxu0
        %1689 = vdwg.mxu0
        %1690 = vrot.lane.b32.xlu0 %v600, 104
        %v1691 = vpop.permute.xlu0 %1690
        %1692 = vrot.lane.b32.xlu0 %v596, 104
        %v1693 = vpop.permute.xlu0 %1692
        %v1694 = vsel %vm601, %v1691, 0
        %v1696 = vsel %vm601, %v1693, 0
        %1698 = vmatprep.subr.mxu0 0.0
        %1699 = vmatpush1.xpose.msra.mxu0 %v1696
        %1700 = vmatprep.subr.mxu0 0.0
        %1701 = vmatpush1.xpose.msra.mxu0 0.0
        %1702 = vmatprep.subr.mxu0 0.0
        %1703 = vmatpush1.xpose.msra.mxu0 0.0
        %1704 = vmatprep.subr.mxu0 0.0
        %1705 = vmatpush1.xpose.msra.mxu0 0.0
        %1706 = vmatprep.subr.mxu0 0.0
        %1707 = vmatpush1.xpose.msra.mxu0 0.0
        %1708 = vmatprep.subr.mxu0 0.0
        %1709 = vmatpush1.xpose.msra.mxu0 0.0
        %1710 = vmatprep.subr.mxu0 0.0
        %1711 = vmatpush1.xpose.msra.mxu0 0.0
        %1712 = vmatprep.subr.mxu0 0.0
        %1713 = vmatpush1.xpose.msra.mxu0 0.0
        %1714 = vmatprep.subr.mxu0 0.0
        %1715 = vmatpush1.xpose.msra.mxu0 0.0
        %1716 = vmatprep.subr.mxu0 0.0
        %1717 = vmatpush1.xpose.msra.mxu0 0.0
        %1718 = vmatprep.subr.mxu0 0.0
        %1719 = vmatpush1.xpose.msra.mxu0 0.0
        %1720 = vmatprep.subr.mxu0 0.0
        %1721 = vmatpush1.xpose.msra.mxu0 0.0
        %1722 = vmatprep.subr.mxu0 0.0
        %1723 = vmatpush1.xpose.msra.mxu0 0.0
        %1724 = vmatprep.subr.mxu0 0.0
        %1725 = vmatpush1.xpose.msra.mxu0 0.0
        %1726 = vmatprep.subr.mxu0 0.0
        %1727 = vmatpush1.xpose.msra.mxu0 0.0
        %1728 = vmatprep.subr.mxu0 0.0
        %1729 = vmatpush1.xpose.msra.mxu0 0.0
        %1730 = vmatprep.subr.mxu0 0.0
        %1731 = vmatpush1.xpose.msra.mxu0 0.0
        %1732 = vmatprep.subr.mxu0 0.0
        %1733 = vmatpush1.xpose.msra.mxu0 0.0
        %1734 = vmatprep.subr.mxu0 0.0
        %1735 = vmatpush1.xpose.msra.mxu0 0.0
        %1736 = vmatprep.subr.mxu0 0.0
        %1737 = vmatpush1.xpose.msra.mxu0 0.0
        %1738 = vmatprep.subr.mxu0 0.0
        %1739 = vmatpush1.xpose.msra.mxu0 0.0
        %1740 = vmatprep.subr.mxu0 0.0
        %1741 = vmatpush1.xpose.msra.mxu0 0.0
        %1742 = vmatprep.subr.mxu0 0.0
        %1743 = vmatpush1.xpose.msra.mxu0 0.0
        %1744 = vmatprep.subr.mxu0 0.0
        %1745 = vmatpush1.xpose.msra.mxu0 0.0
        %1746 = vmatprep.subr.mxu0 0.0
        %1747 = vmatpush1.xpose.msra.mxu0 0.0
        %1748 = vmatprep.subr.mxu0 0.0
        %1749 = vmatpush1.xpose.msra.mxu0 0.0
        %1750 = vmatprep.subr.mxu0 0.0
        %1751 = vmatpush1.xpose.msra.mxu0 0.0
        %1752 = vmatprep.subr.mxu0 0.0
        %1753 = vmatpush1.xpose.msra.mxu0 0.0
        %1754 = vmatprep.subr.mxu0 0.0
        %1755 = vmatpush1.xpose.msra.mxu0 0.0
        %1756 = vmatprep.subr.mxu0 0.0
        %1757 = vmatpush1.xpose.msra.mxu0 0.0
        %1758 = vmatprep.subr.mxu0 0.0
        %1759 = vmatpush1.xpose.msra.mxu0 0.0
        %1760 = vmatprep.subr.mxu0 0.0
        %1761 = vmatpush1.xpose.msra.mxu0 0.0
        %1762 = vmatprep.mubr.f32.mxu0 0.0
        %1763 = vmatmul.mubr.f32.gmra.mrb[0].mxu0 %v1694
        %v1764 = vpop.f32.mrb[0].mxu0
        %v1765 = vadd.f32 0.0, %v1764
        %v1766 = vpop.f32.mrb[0].mxu0
        %1767 = vdwg.mxu0
        %v1768 = vsel %vm601, %v1687, -inf
        %1769 = vmax.xlane.f32.xlu0 %v1768
        %v1770 = vpop.xlane.xlu0 %1769
        %v1771 = vsel %vm601, %v1765, -inf
        %1772 = vmax.xlane.f32.xlu0 %v1771
        %v1773 = vpop.xlane.xlu0 %1772
        %v1774 = vsub.f32 %v1687, %v1770
        %v1775 = vsub.f32 %v1765, %v1773
        %v1776 = vmul.f32 %v1774, 1.442695
        %v1777 = vpow.pop %v1776
        %v1778 = vmul.f32 %v1775, 1.442695
        %v1779 = vpow.pop %v1778
        %v1780 = vsel %vm601, %v1777, 0.0
        %1781 = vadd.xlane.f32.xlu0 %v1780
        %v1782 = vpop.xlane.xlu0 %1781
        %v1783 = vsel %vm601, %v1779, 0.0
        %1784 = vadd.xlane.f32.xlu0 %v1783
        %v1785 = vpop.xlane.xlu0 %1784
        %v1786 = vrcp.pop %v1782
        %v1787 = vrcp.pop %v1785
        %v1788 = vmul.f32 %v1777, %v1786
        %v1789 = vmul.f32 %v1779, %v1787
        %1790 = vrot.lane.b32.xlu0 %v591, 72
        %v1791 = vpop.permute.xlu0 %1790
        %v1794 = vsel %vm601, %v1788, 0
        %1796 = vmatprep.subr.mxu0 0.0
        %1797 = vmatpush1.msra.mxu0 %v1791
        %1798 = vmatprep.subr.mxu0 0.0
        %1799 = vmatpush1.msra.mxu0 0.0
        %1800 = vmatprep.subr.mxu0 0.0
        %1801 = vmatpush1.msra.mxu0 0.0
        %1802 = vmatprep.subr.mxu0 0.0
        %1803 = vmatpush1.msra.mxu0 0.0
        %1804 = vmatprep.subr.mxu0 0.0
        %1805 = vmatpush1.msra.mxu0 0.0
        %1806 = vmatprep.subr.mxu0 0.0
        %1807 = vmatpush1.msra.mxu0 0.0
        %1808 = vmatprep.subr.mxu0 0.0
        %1809 = vmatpush1.msra.mxu0 0.0
        %1810 = vmatprep.subr.mxu0 0.0
        %1811 = vmatpush1.msra.mxu0 0.0
        %1812 = vmatprep.subr.mxu0 0.0
        %1813 = vmatpush1.msra.mxu0 0.0
        %1814 = vmatprep.subr.mxu0 0.0
        %1815 = vmatpush1.msra.mxu0 0.0
        %1816 = vmatprep.subr.mxu0 0.0
        %1817 = vmatpush1.msra.mxu0 0.0
        %1818 = vmatprep.subr.mxu0 0.0
        %1819 = vmatpush1.msra.mxu0 0.0
        %1820 = vmatprep.subr.mxu0 0.0
        %1821 = vmatpush1.msra.mxu0 0.0
        %1822 = vmatprep.subr.mxu0 0.0
        %1823 = vmatpush1.msra.mxu0 0.0
        %1824 = vmatprep.subr.mxu0 0.0
        %1825 = vmatpush1.msra.mxu0 0.0
        %1826 = vmatprep.subr.mxu0 0.0
        %1827 = vmatpush1.msra.mxu0 0.0
        %1828 = vmatprep.subr.mxu0 0.0
        %1829 = vmatpush1.msra.mxu0 0.0
        %1830 = vmatprep.subr.mxu0 0.0
        %1831 = vmatpush1.msra.mxu0 0.0
        %1832 = vmatprep.subr.mxu0 0.0
        %1833 = vmatpush1.msra.mxu0 0.0
        %1834 = vmatprep.subr.mxu0 0.0
        %1835 = vmatpush1.msra.mxu0 0.0
        %1836 = vmatprep.subr.mxu0 0.0
        %1837 = vmatpush1.msra.mxu0 0.0
        %1838 = vmatprep.subr.mxu0 0.0
        %1839 = vmatpush1.msra.mxu0 0.0
        %1840 = vmatprep.subr.mxu0 0.0
        %1841 = vmatpush1.msra.mxu0 0.0
        %1842 = vmatprep.subr.mxu0 0.0
        %1843 = vmatpush1.msra.mxu0 0.0
        %1844 = vmatprep.subr.mxu0 0.0
        %1845 = vmatpush1.msra.mxu0 0.0
        %1846 = vmatprep.subr.mxu0 0.0
        %1847 = vmatpush1.msra.mxu0 0.0
        %1848 = vmatprep.subr.mxu0 0.0
        %1849 = vmatpush1.msra.mxu0 0.0
        %1850 = vmatprep.subr.mxu0 0.0
        %1851 = vmatpush1.msra.mxu0 0.0
        %1852 = vmatprep.subr.mxu0 0.0
        %1853 = vmatpush1.msra.mxu0 0.0
        %1854 = vmatprep.subr.mxu0 0.0
        %1855 = vmatpush1.msra.mxu0 0.0
        %1856 = vmatprep.subr.mxu0 0.0
        %1857 = vmatpush1.msra.mxu0 0.0
        %1858 = vmatprep.subr.mxu0 0.0
        %1859 = vmatpush1.msra.mxu0 0.0
        %1860 = vmatprep.mubr.f32.mxu0 0.0
        %1861 = vmatmul.mubr.f32.gmra.mrb[0].mxu0 %v1794
        %v1862 = vpop.f32.mrb[0].mxu0
        %v1863 = vadd.f32 0.0, %v1862
        %v1864 = vpop.f32.mrb[0].mxu0
        %1865 = vdwg.mxu0
        %1866 = vrot.lane.b32.xlu0 %v596, 72
        %v1867 = vpop.permute.xlu0 %1866
        %v1870 = vsel %vm601, %v1789, 0
        %1872 = vmatprep.subr.mxu0 0.0
        %1873 = vmatpush1.msra.mxu0 %v1867
        %1874 = vmatprep.subr.mxu0 0.0
        %1875 = vmatpush1.msra.mxu0 0.0
        %1876 = vmatprep.subr.mxu0 0.0
        %1877 = vmatpush1.msra.mxu0 0.0
        %1878 = vmatprep.subr.mxu0 0.0
        %1879 = vmatpush1.msra.mxu0 0.0
        %1880 = vmatprep.subr.mxu0 0.0
        %1881 = vmatpush1.msra.mxu0 0.0
        %1882 = vmatprep.subr.mxu0 0.0
        %1883 = vmatpush1.msra.mxu0 0.0
        %1884 = vmatprep.subr.mxu0 0.0
        %1885 = vmatpush1.msra.mxu0 0.0
        %1886 = vmatprep.subr.mxu0 0.0
        %1887 = vmatpush1.msra.mxu0 0.0
        %1888 = vmatprep.subr.mxu0 0.0
        %1889 = vmatpush1.msra.mxu0 0.0
        %1890 = vmatprep.subr.mxu0 0.0
        %1891 = vmatpush1.msra.mxu0 0.0
        %1892 = vmatprep.subr.mxu0 0.0
        %1893 = vmatpush1.msra.mxu0 0.0
        %1894 = vmatprep.subr.mxu0 0.0
        %1895 = vmatpush1.msra.mxu0 0.0
        %1896 = vmatprep.subr.mxu0 0.0
        %1897 = vmatpush1.msra.mxu0 0.0
        %1898 = vmatprep.subr.mxu0 0.0
        %1899 = vmatpush1.msra.mxu0 0.0
        %1900 = vmatprep.subr.mxu0 0.0
        %1901 = vmatpush1.msra.mxu0 0.0
        %1902 = vmatprep.subr.mxu0 0.0
        %1903 = vmatpush1.msra.mxu0 0.0
        %1904 = vmatprep.subr.mxu0 0.0
        %1905 = vmatpush1.msra.mxu0 0.0
        %1906 = vmatprep.subr.mxu0 0.0
        %1907 = vmatpush1.msra.mxu0 0.0
        %1908 = vmatprep.subr.mxu0 0.0
        %1909 = vmatpush1.msra.mxu0 0.0
        %1910 = vmatprep.subr.mxu0 0.0
        %1911 = vmatpush1.msra.mxu0 0.0
        %1912 = vmatprep.subr.mxu0 0.0
        %1913 = vmatpush1.msra.mxu0 0.0
        %1914 = vmatprep.subr.mxu0 0.0
        %1915 = vmatpush1.msra.mxu0 0.0
        %1916 = vmatprep.subr.mxu0 0.0
        %1917 = vmatpush1.msra.mxu0 0.0
        %1918 = vmatprep.subr.mxu0 0.0
        %1919 = vmatpush1.msra.mxu0 0.0
        %1920 = vmatprep.subr.mxu0 0.0
        %1921 = vmatpush1.msra.mxu0 0.0
        %1922 = vmatprep.subr.mxu0 0.0
        %1923 = vmatpush1.msra.mxu0 0.0
        %1924 = vmatprep.subr.mxu0 0.0
        %1925 = vmatpush1.msra.mxu0 0.0
        %1926 = vmatprep.subr.mxu0 0.0
        %1927 = vmatpush1.msra.mxu0 0.0
        %1928 = vmatprep.subr.mxu0 0.0
        %1929 = vmatpush1.msra.mxu0 0.0
        %1930 = vmatprep.subr.mxu0 0.0
        %1931 = vmatpush1.msra.mxu0 0.0
        %1932 = vmatprep.subr.mxu0 0.0
        %1933 = vmatpush1.msra.mxu0 0.0
        %1934 = vmatprep.subr.mxu0 0.0
        %1935 = vmatpush1.msra.mxu0 0.0
        %1936 = vmatprep.mubr.f32.mxu0 0.0
        %1937 = vmatmul.mubr.f32.gmra.mrb[0].mxu0 %v1870
        %v1938 = vpop.f32.mrb[0].mxu0
        %v1939 = vadd.f32 0.0, %v1938
        %v1940 = vpop.f32.mrb[0].mxu0
        %1941 = vdwg.mxu0
        %1944 = vrot.lane.b32.xlu0 %v1863, 24
        %v1945 = vpop.permute.xlu0 %1944
        %1946 = vrot.lane.b32.xlu0 %v1939, 24
        %v1947 = vpop.permute.xlu0 %1946
        %vm1950 = vcmask 261312
        %1951 = vst.msk [vmem:[#allocation2] sm:$0xff] %vm1950, %v1945
        %1952 = vst.msk [vmem:[#allocation2 + $0x8] sm:$0xff] %vm1950, %v1947
        %v1953 = vld [vmem:[#allocation2] sm:$0xff]
        %v1954 = vld [vmem:[#allocation2 + $0x8] sm:$0xff]
        %v1955 = vadd.f32 %v499, %v1953
        %v1956 = vadd.f32 %v504, %v1954
        %v1957 = vld [vmem:[#allocation11] sm:$0xff]
        %v1958 = vld [vmem:[#allocation11 + $0x8] sm:$0xff]
        %v1959 = vld [vmem:[#allocation11 + $0x10] sm:$0xff]
        %v1960 = vld [vmem:[#allocation11 + $0x18] sm:$0xff]
        %v1961 = vld [vmem:[%s7] sm:$0x1]
        %v1963 = vlaneseq
        %v1964 = vshrl.u32 %v1963, 7
        %v1965 = vsub.s32 0, %v1964
        %v1966 = vrot.slane %v1961, %v1965
        %v1969 = vsel %vm425, %v1955, 0
        %v1972 = vsel %vm425, %v1956, 0
        %1974 = vmatprep.subr.mxu0 0.0
        %1975 = vmatpush1.msra.mxu0 %v1957
        %1976 = vmatprep.subr.mxu0 0.0
        %1977 = vmatpush1.msra.mxu0 %v1958
        %1978 = vmatprep.subr.mxu0 0.0
        %1979 = vmatpush1.msra.mxu0 %v1959
        %1980 = vmatprep.subr.mxu0 0.0
        %1981 = vmatpush1.msra.mxu0 %v1960
        %1982 = vmatprep.subr.mxu0 0.0
        %1983 = vmatpush1.msra.mxu0 0.0
        %1984 = vmatprep.subr.mxu0 0.0
        %1985 = vmatpush1.msra.mxu0 0.0
        %1986 = vmatprep.subr.mxu0 0.0
        %1987 = vmatpush1.msra.mxu0 0.0
        %1988 = vmatprep.subr.mxu0 0.0
        %1989 = vmatpush1.msra.mxu0 0.0
        %1990 = vmatprep.subr.mxu0 0.0
        %1991 = vmatpush1.msra.mxu0 0.0
        %1992 = vmatprep.subr.mxu0 0.0
        %1993 = vmatpush1.msra.mxu0 0.0
        %1994 = vmatprep.subr.mxu0 0.0
        %1995 = vmatpush1.msra.mxu0 0.0
        %1996 = vmatprep.subr.mxu0 0.0
        %1997 = vmatpush1.msra.mxu0 0.0
        %1998 = vmatprep.subr.mxu0 0.0
        %1999 = vmatpush1.msra.mxu0 0.0
        %2000 = vmatprep.subr.mxu0 0.0
        %2001 = vmatpush1.msra.mxu0 0.0
        %2002 = vmatprep.subr.mxu0 0.0
        %2003 = vmatpush1.msra.mxu0 0.0
        %2004 = vmatprep.subr.mxu0 0.0
        %2005 = vmatpush1.msra.mxu0 0.0
        %2006 = vmatprep.subr.mxu0 0.0
        %2007 = vmatpush1.msra.mxu0 0.0
        %2008 = vmatprep.subr.mxu0 0.0
        %2009 = vmatpush1.msra.mxu0 0.0
        %2010 = vmatprep.subr.mxu0 0.0
        %2011 = vmatpush1.msra.mxu0 0.0
        %2012 = vmatprep.subr.mxu0 0.0
        %2013 = vmatpush1.msra.mxu0 0.0
        %2014 = vmatprep.subr.mxu0 0.0
        %2015 = vmatpush1.msra.mxu0 0.0
        %2016 = vmatprep.subr.mxu0 0.0
        %2017 = vmatpush1.msra.mxu0 0.0
        %2018 = vmatprep.subr.mxu0 0.0
        %2019 = vmatpush1.msra.mxu0 0.0
        %2020 = vmatprep.subr.mxu0 0.0
        %2021 = vmatpush1.msra.mxu0 0.0
        %2022 = vmatprep.subr.mxu0 0.0
        %2023 = vmatpush1.msra.mxu0 0.0
        %2024 = vmatprep.subr.mxu0 0.0
        %2025 = vmatpush1.msra.mxu0 0.0
        %2026 = vmatprep.subr.mxu0 0.0
        %2027 = vmatpush1.msra.mxu0 0.0
        %2028 = vmatprep.subr.mxu0 0.0
        %2029 = vmatpush1.msra.mxu0 0.0
        %2030 = vmatprep.subr.mxu0 0.0
        %2031 = vmatpush1.msra.mxu0 0.0
        %2032 = vmatprep.subr.mxu0 0.0
        %2033 = vmatpush1.msra.mxu0 0.0
        %2034 = vmatprep.subr.mxu0 0.0
        %2035 = vmatpush1.msra.mxu0 0.0
        %2036 = vmatprep.subr.mxu0 0.0
        %2037 = vmatpush1.msra.mxu0 0.0
        %2038 = vmatprep.mubr.f32.mxu0 0.0
        %2039 = vmatmul.mubr.f32.gmra.mrb[0].mxu0 %v1969
        %v2040 = vpop.f32.mrb[0].mxu0
        %v2041 = vadd.f32 %v1966, %v2040
        %v2042 = vpop.f32.mrb[0].mxu0
        %2043 = vmatprep.mubr.f32.mxu0 0.0
        %2044 = vmatmul.mubr.f32.gmra.mrb[0].mxu0 %v1972
        %v2045 = vpop.f32.mrb[0].mxu0
        %v2046 = vadd.f32 %v1966, %v2045
        %v2047 = vpop.f32.mrb[0].mxu0
        %2048 = vdwg.mxu0
        %v2049 = vmax.f32 %v2041, 0.0
        %v2050 = vmax.f32 %v2046, 0.0
        %v2051 = vadd.f32 %v1955, %v2049
        %v2052 = vadd.f32 %v1956, %v2050
        %2053 = vst.msk [vmem:[%s406] sm:$0xff] %vm425, %v2051
        %2054 = vst.msk [vmem:[%s406 + $0x8] sm:$0xff] %vm425, %v2052
        %s2055 = sand.u32 %s215, 1
        %s2056 = scalar_lea.sflag [#allocation5], %s2055
        %s2057 = sand.u32 %s215, 1
        %s2058 = smul.addr %s2057, 16
        %s2059 = scalar_lea.vmem [#allocation12], %s2058
        // Predicated region
        $region73: #{tpu_custom_call.1} parent=51 // pred_check
          %p2060 = pneg %p225
        $region74: #{tpu_custom_call.1} parent=51 // pred_check_branch
          %2062 = sbr.rel (%p2060) target = $region76
        $region75: #{tpu_custom_call.1} parent=51 // pred_region
          %s2063 = smul.u32 2, %s29
          %s2065 = ssub.s32 256, 256
          %2066 = vsyncadd %s2056, %s2065
          %s2067 = smul.addr %s2063, 128
          %s2068 = scalar_lea.hbm %s8, %s2067
          %s2069 = sshll.u32 %s2059, 4
          %s2070 = int_to_ptr.vmem [resolvable:$true] %s2069
          %2075 = dma.vmem_to_hbm [thread:$0]  %s2070, 256, %s2068, %s2056, 128, 128, 8
        $region76: #{tpu_custom_call.1} parent=51 // pred_fallthru
          _
      $region52: #{tpu_custom_call.1} parent=5 // pred_fallthru
        _
      %p2076 = scmp.le.s32.totalorder 2, %s24
      // Predicated region
      $region77: #{tpu_custom_call.1} parent=5 // pred_check
        %p2077 = pneg %p2076
      $region78: #{tpu_custom_call.1} parent=5 // pred_check_branch
        %2079 = sbr.rel (%p2077) target = $region80
      $region79: #{tpu_custom_call.1} parent=5 // pred_region
        %s2080 = ssub.s32 %s24, 2
        // Predicated region
        $region81: #{tpu_custom_call.1} parent=79 // pred_check
          %p2081 = pneg %p231
        $region82: #{tpu_custom_call.1} parent=79 // pred_check_branch
          %2083 = sbr.rel (%p2081) target = $region84
        $region83: #{tpu_custom_call.1} parent=79 // pred_region
          %s2084 = sand.u32 %s216, 1
          %s2085 = scalar_lea.sflag [#allocation5], %s2084
          %s2086 = sand.u32 %s216, 1
          %s2087 = smul.addr %s2086, 16
          %s2088 = scalar_lea.vmem [#allocation12], %s2087
          %2089 = dma.done %s2085, 256
        $region84: #{tpu_custom_call.1} parent=79 // pred_fallthru
          _
      $region80: #{tpu_custom_call.1} parent=5 // pred_fallthru
        _
    $region6: #{tpu_custom_call.1} parent=1 // loop_footer
      %s28 = sadd.s32 1, %s24
    $region7: #{tpu_custom_call.1} parent=1 // loop_footer_branch
      %23 = sbr.rel target = $region3
    $region8: #{tpu_custom_call.1} parent=1 // loop_exit
      _
    %2090 = vsyncpa [#allocation4], 1
    %s2091 = scalar_lea.sflag [#allocation4], 1
    %2092 = vsyncpa %s2091, 1
    %2093 = vsyncpa [#allocation7], 1
    %s2094 = scalar_lea.sflag [#allocation7], 1
    %2095 = vsyncpa %s2094, 1
    %2096 = vsyncpa [#allocation10], 1
    %2097 = vsyncpa [#allocation5], 1
    %s2098 = scalar_lea.sflag [#allocation5], 1
    %2099 = vsyncpa %s2098, 1

</llo_original>
